<compile_context>
chip_gen: v5e
topology: v5e:2x2
jax: 0.10.0
libtpu: 0.0.40
codegen_flags: <defaults>
</compile_context>

<pallas_src>
import functools
import math

import jax
import jax.numpy as jnp
from jax import lax
from jax.experimental import pallas as pl
from jax.experimental.pallas import tpu as pltpu

N_EMBD = 128        # n_embd from the module
BLOCK_SIZE = 128    # block_size (causal-mask buffer size); only T <= block_size is used

_TARGET_STEP_ROWS = 1024   # fused-QKV M-rows per grid step (review item 1)
_MIN_SPLIT_ROWS = 256      # only prefer grid >= 2 if each step keeps >= this many rows
_MAX_CHUNK_ROWS = 256      # rows per in-kernel chunk: keeps MXU M-dim full (>=256 when
                           # possible) while bounding live f32 intermediates

_SINGLE_BUFFER_CONSTS_OK = True   # flipped off if pl.Buffered(1) is rejected by this build


def _mha_kernel(x_ref, wqkv_ref, wp_ref, bp_ref, o_ref, *,
                num_heads, head_size, seq_len, bt, bc, causal_mask):
    C = num_heads * head_size
    T = seq_len
    R = bc * T                    # rows per chunk (multiple of 8 since T % 8 == 0)
    nc = bt // bc                 # chunks per grid step

    # Hoisted: causal-mask additive bias.  Finite large-negative (not -inf) so a
    # hypothetical fully-masked row degrades to uniform softmax rather than NaN.
    if causal_mask:
        row = lax.broadcasted_iota(jnp.int32, (T, T), 0)
        col = lax.broadcasted_iota(jnp.int32, (T, T), 1)
        mask_bias = jnp.where(col <= row, 0.0, -1e30).astype(jnp.float32)
    else:
        mask_bias = None

    def chunk(c):
        b0 = c * bc               # first batch row of this chunk

        # ---- fused QKV projection: one (R, C) @ (C, 3C) bf16 MXU matmul ----------
        # scale is pre-folded into the wq columns; single cast of the f32 accumulator
        # to bf16 because every consumer is a bf16 MXU operand.
        xc = x_ref[pl.ds(b0, bc)].reshape(R, C).astype(jnp.bfloat16)
        qkv = jnp.dot(xc, wqkv_ref[...],
                      preferred_element_type=jnp.float32).astype(jnp.bfloat16)

        outs = []
        for h in range(num_heads):        # static unroll; one head view per (chunk, head)
            lo = h * head_size
            qh = qkv[:, lo:lo + head_size].reshape(bc, T, head_size)
            kh = qkv[:, C + lo:C + lo + head_size].reshape(bc, T, head_size)
            vh = qkv[:, 2 * C + lo:2 * C + lo + head_size].reshape(bc, T, head_size)

            # Scores, batched over the bc batch rows so MXU pushes pipeline
            # back-to-back (review item 10); f32 accumulation.
            wei = jnp.einsum("btd,bsd->bts", qh, kh,
                             preferred_element_type=jnp.float32)       # (bc, T, T)
            if mask_bias is not None:
                wei = wei + mask_bias

            # Numerically stable softmax; elementwise math stays f32 (v5e-safe),
            # divide goes to the EUP via the approximate reciprocal.
            wei = jnp.exp(wei - jnp.max(wei, axis=-1, keepdims=True))
            inv = pl.reciprocal(jnp.sum(wei, axis=-1, keepdims=True), approx=True)
            p = (wei * inv).astype(jnp.bfloat16)

            ho = jnp.einsum("bts,bsd->btd", p, vh,
                            preferred_element_type=jnp.float32)        # (bc, T, D)
            outs.append(ho.astype(jnp.bfloat16))

        # ---- head concat + ONE output projection per chunk (K=128, M=R>=256) -----
        cat = jnp.concatenate(outs, axis=-1).reshape(R, C)              # (R, C) bf16
        proj = jnp.dot(cat, wp_ref[...],
                       preferred_element_type=jnp.float32) + bp_ref[...]
        o_ref[pl.ds(b0, bc)] = proj.reshape(bc, T, C).astype(o_ref.dtype)

    if nc == 1:
        chunk(0)
    else:
        pl.loop(0, nc)(chunk)


def _pick_batch_tile(B, T):
    """Batch rows per grid step (review items 1 & 6)."""
    divisors = [d for d in range(1, B + 1) if B % d == 0]
    fitting = [d for d in divisors if d * T <= _TARGET_STEP_ROWS] or [1]
    best = max(fitting)                      # biggest tile within the per-step row target
    # Prefer grid >= 2 (megacore / v7x TC balance) only when each step still gets
    # >= _MIN_SPLIT_ROWS rows of work.
    split = [d for d in fitting if B // d >= 2 and d * T >= _MIN_SPLIT_ROWS]
    if split:
        best = max(split)
    return best


def _pick_attention_chunk(bt, T):
    """Batch rows per in-kernel chunk: biggest divisor of bt within _MAX_CHUNK_ROWS rows."""
    best = 1
    for d in range(1, bt + 1):
        if bt % d == 0 and d * T <= _MAX_CHUNK_ROWS:
            best = d
    return best


def _build_call(B, T, C, bt, bc, num_heads, head_size, causal_mask, out_dtype,
                single_buffer_consts):
    const_kw = {}
    if single_buffer_consts:
        # Constant-index operands are fetched once; single buffering trims VMEM and
        # buffer rotation (review item 8).
        const_kw = dict(pipeline_mode=pl.Buffered(1))

    kernel = functools.partial(
        _mha_kernel, num_heads=num_heads, head_size=head_size,
        seq_len=T, bt=bt, bc=bc, causal_mask=causal_mask)

    return pl.pallas_call(
        kernel,
        out_shape=jax.ShapeDtypeStruct((B, T, C), out_dtype),
        grid_spec=pltpu.PrefetchScalarGridSpec(
            num_scalar_prefetch=0,
            grid=(B // bt,),
            in_specs=[
                pl.BlockSpec((bt, T, C), lambda g: (g, 0, 0)),            # x tile
                pl.BlockSpec((C, 3 * C), lambda g: (0, 0), **const_kw),   # wq*scale|wk|wv
                pl.BlockSpec((C, C), lambda g: (0, 0), **const_kw),       # wp (bf16)
                pl.BlockSpec((1, C), lambda g: (0, 0), **const_kw),       # bp (f32)
            ],
            out_specs=pl.BlockSpec((bt, T, C), lambda g: (g, 0, 0)),
        ),
        compiler_params=pltpu.CompilerParams(
            dimension_semantics=("parallel",)),
    )


def multi_head_attention(x, wq, wk, wv, wp, bp, *, num_heads, head_size,
                         causal_mask=False):
    """x: (B, T, C) float32; weights already transposed to (in, out) layout."""
    global _SINGLE_BUFFER_CONSTS_OK
    B, T, C = x.shape
    assert C == N_EMBD and num_heads * head_size == N_EMBD
    assert T <= BLOCK_SIZE
    # TODO(synk): pad T (with key masking) for seq lengths not divisible by 8.
    assert T % 8 == 0, "T must be a multiple of 8 (sublane tile) for free reshapes"

    bt = _pick_batch_tile(B, T)
    bc = _pick_attention_chunk(bt, T)

    # Fuse Q/K/V weights into one (C, 3C) bf16 operand with 1/sqrt(D) folded into
    # the wq columns (review item 3).
    scale = head_size ** (-0.5)
    wqkv = jnp.concatenate([wq * scale, wk, wv], axis=1).astype(jnp.bfloat16)
    wp_b = wp.astype(jnp.bfloat16)
    bp_f = bp.reshape(1, C).astype(jnp.float32)

    args = (x, wqkv, wp_b, bp_f)
    if _SINGLE_BUFFER_CONSTS_OK:
        try:
            return _build_call(B, T, C, bt, bc, num_heads, head_size, causal_mask,
                               x.dtype, True)(*args)
        except Exception:
            # This build rejects pl.Buffered(1); fall back to default double
            # buffering (the item is only a minor VMEM/scheduling cleanup).
            _SINGLE_BUFFER_CONSTS_OK = False
    return _build_call(B, T, C, bt, bc, num_heads, head_size, causal_mask,
                       x.dtype, False)(*args)


def reference_mha(x, wq, wk, wv, wp, bp, *, num_heads, head_size,
                  causal_mask=False):
    """Pure-JAX f32 reference of the PyTorch forward (eval mode)."""
    q = x @ wq
    k = x @ wk
    v = x @ wv
    B, T, _ = x.shape
    outs = []
    for h in range(num_heads):
        lo = h * head_size
        qh, kh, vh = (a[..., lo:lo + head_size] for a in (q, k, v))
        wei = jnp.einsum("btd,bsd->bts", qh, kh) * head_size ** (-0.5)
        if causal_mask:
            tril = jnp.tril(jnp.ones((T, T), dtype=bool))
            wei = jnp.where(tril, wei, -jnp.inf)
        wei = jax.nn.softmax(wei, axis=-1)
        outs.append(jnp.einsum("bts,bsd->btd", wei, vh))
    cat = jnp.concatenate(outs, axis=-1)
    return cat @ wp + bp.reshape(1, -1)


if __name__ == "__main__":
    num_heads, head_size = 4, 32          # num_heads * head_size == n_embd == 128
    C = N_EMBD

    key = jax.random.PRNGKey(0)
    kx, kq, kk, kv, kp, kb = jax.random.split(key, 6)

    bound = 1.0 / math.sqrt(C)
    # Stored pre-transposed as (in, out) so the kernel computes x @ W.
    wq = jax.random.uniform(kq, (C, num_heads * head_size), jnp.float32, -bound, bound)
    wk = jax.random.uniform(kk, (C, num_heads * head_size), jnp.float32, -bound, bound)
    wv = jax.random.uniform(kv, (C, num_heads * head_size), jnp.float32, -bound, bound)
    wp = jax.random.uniform(kp, (C, C), jnp.float32, -bound, bound)
    bp = jax.random.uniform(kb, (1, C), jnp.float32, -bound, bound)

    # (B=2, T=8): small sanity shape (grid=1, single chunk).
    # (B=128, T=8): exercises the megacore grid split (grid=2, bt=64) and the
    #               in-kernel chunk loop (bc=32, 2 chunks/step).
    for (B, T) in ((2, 8), (128, 8)):
        x = jax.random.normal(kx, (B, T, C), dtype=jnp.float32)
        for mask in (False, True):
            out = multi_head_attention(x, wq, wk, wv, wp, bp,
                                       num_heads=num_heads, head_size=head_size,
                                       causal_mask=mask)
            out = jax.block_until_ready(out)
            ref = reference_mha(x, wq, wk, wv, wp, bp,
                                num_heads=num_heads, head_size=head_size,
                                causal_mask=mask)
            assert out.shape == (B, T, C)
            # bf16 MXU operands + approx reciprocal -> looser tolerance vs f32 ref.
            assert jnp.allclose(out, ref, atol=5e-2, rtol=5e-2), \
                f"mismatch (B={B}, T={T}, mask={mask})"

    print("KERNEL_OK")
</pallas_src>

<mosaic_0001>
module attributes {stable_mosaic.version = 11 : i64} {
  func.func @_mha_kernel(%arg0: i32, %arg1: memref<2x8x128xf32, #tpu.memory_space<vmem>>, %arg2: memref<128x384xbf16, #tpu.memory_space<vmem>>, %arg3: memref<128x128xbf16, #tpu.memory_space<vmem>>, %arg4: memref<1x128xf32, #tpu.memory_space<vmem>>, %arg5: memref<2x8x128xf32, #tpu.memory_space<vmem>>) attributes {dimension_semantics = [#tpu.dimension_semantics<parallel>], iteration_bounds = array<i64: 1>, scalar_prefetch = 0 : i64, scratch_operands = 0 : i64, tpu.core_type = #tpu.core_type<tc>, window_params = [{transform_indices = @transform_0, window_bounds = array<i64: 2, 8, 128>}, {pipeline_mode = #tpu.pipeline_mode<synchronous>, transform_indices = @transform_1, window_bounds = array<i64: 128, 384>}, {pipeline_mode = #tpu.pipeline_mode<synchronous>, transform_indices = @transform_2, window_bounds = array<i64: 128, 128>}, {pipeline_mode = #tpu.pipeline_mode<synchronous>, transform_indices = @transform_3, window_bounds = array<i64: 1, 128>}, {transform_indices = @transform_4, window_bounds = array<i64: 2, 8, 128>}]} {
    %c0 = arith.constant 0 : index
    %c0_0 = arith.constant 0 : index
    %c0_1 = arith.constant 0 : index
    %0 = vector.load %arg1[%c0, %c0_0, %c0_1] : memref<2x8x128xf32, #tpu.memory_space<vmem>>, vector<2x8x128xf32>
    %1 = vector.shape_cast %0 : vector<2x8x128xf32> to vector<16x128xf32>
    %2 = arith.truncf %1 : vector<16x128xf32> to vector<16x128xbf16>
    %c0_2 = arith.constant 0 : index
    %c0_3 = arith.constant 0 : index
    %3 = vector.load %arg2[%c0_2, %c0_3] : memref<128x384xbf16, #tpu.memory_space<vmem>>, vector<128x384xbf16>
    %cst = arith.constant dense<0.000000e+00> : vector<16x384xf32>
    %4 = tpu.matmul %2, %3, %cst {dimension_numbers = #tpu.dot_dimension_numbers<[1], [0], [0], [1], [0, 0, 1, 1], [], []>} : vector<16x128xbf16>, vector<128x384xbf16>, vector<16x384xf32> -> vector<16x384xf32>
    %5 = arith.truncf %4 : vector<16x384xf32> to vector<16x384xbf16>
    %6 = vector.extract_strided_slice %5 {offsets = [0, 0], sizes = [16, 32], strides = [1, 1]} : vector<16x384xbf16> to vector<16x32xbf16>
    %7 = vector.shape_cast %6 : vector<16x32xbf16> to vector<2x8x32xbf16>
    %8 = vector.extract_strided_slice %5 {offsets = [0, 128], sizes = [16, 32], strides = [1, 1]} : vector<16x384xbf16> to vector<16x32xbf16>
    %9 = vector.shape_cast %8 : vector<16x32xbf16> to vector<2x8x32xbf16>
    %10 = vector.extract_strided_slice %5 {offsets = [0, 256], sizes = [16, 32], strides = [1, 1]} : vector<16x384xbf16> to vector<16x32xbf16>
    %11 = vector.shape_cast %10 : vector<16x32xbf16> to vector<2x8x32xbf16>
    "tpu.trace_start"() <{level = 10 : i32, message = "btd,bsd->bts"}> : () -> ()
    %cst_4 = arith.constant dense<0.000000e+00> : vector<2x8x8xf32>
    %12 = tpu.matmul %7, %9, %cst_4 {dimension_numbers = #tpu.dot_dimension_numbers<[2], [2], [1], [1], [0, 0, 0, 1, 1, 1], [0], [0]>} : vector<2x8x32xbf16>, vector<2x8x32xbf16>, vector<2x8x8xf32> -> vector<2x8x8xf32>
    "tpu.trace_stop"() : () -> ()
    %cst_5 = arith.constant dense<0xFF800000> : vector<2x8xf32>
    %13 = vector.multi_reduction <maximumf>, %12, %cst_5 [2] : vector<2x8x8xf32> to vector<2x8xf32>
    %14 = vector.shape_cast %13 : vector<2x8xf32> to vector<2x8x1xf32>
    %15 = vector.broadcast %14 : vector<2x8x1xf32> to vector<2x8x8xf32>
    %16 = arith.subf %12, %15 : vector<2x8x8xf32>
    %17 = math.exp %16 : vector<2x8x8xf32>
    %cst_6 = arith.constant dense<0.000000e+00> : vector<2x8xf32>
    %18 = vector.multi_reduction <add>, %17, %cst_6 [2] : vector<2x8x8xf32> to vector<2x8xf32>
    %19 = vector.shape_cast %18 : vector<2x8xf32> to vector<2x8x1xf32>
    %20 = tpu.reciprocal %19 {approx = true} : vector<2x8x1xf32> -> vector<2x8x1xf32>
    %21 = vector.broadcast %20 : vector<2x8x1xf32> to vector<2x8x8xf32>
    %22 = arith.mulf %17, %21 : vector<2x8x8xf32>
    %23 = arith.truncf %22 : vector<2x8x8xf32> to vector<2x8x8xbf16>
    "tpu.trace_start"() <{level = 10 : i32, message = "bts,bsd->btd"}> : () -> ()
    %cst_7 = arith.constant dense<0.000000e+00> : vector<2x8x32xf32>
    %24 = tpu.matmul %23, %11, %cst_7 {dimension_numbers = #tpu.dot_dimension_numbers<[2], [1], [1], [2], [0, 0, 0, 1, 1, 2], [0], [0]>} : vector<2x8x8xbf16>, vector<2x8x32xbf16>, vector<2x8x32xf32> -> vector<2x8x32xf32>
    "tpu.trace_stop"() : () -> ()
    %25 = arith.truncf %24 : vector<2x8x32xf32> to vector<2x8x32xbf16>
    %26 = vector.extract_strided_slice %5 {offsets = [0, 32], sizes = [16, 32], strides = [1, 1]} : vector<16x384xbf16> to vector<16x32xbf16>
    %27 = vector.shape_cast %26 : vector<16x32xbf16> to vector<2x8x32xbf16>
    %28 = vector.extract_strided_slice %5 {offsets = [0, 160], sizes = [16, 32], strides = [1, 1]} : vector<16x384xbf16> to vector<16x32xbf16>
    %29 = vector.shape_cast %28 : vector<16x32xbf16> to vector<2x8x32xbf16>
    %30 = vector.extract_strided_slice %5 {offsets = [0, 288], sizes = [16, 32], strides = [1, 1]} : vector<16x384xbf16> to vector<16x32xbf16>
    %31 = vector.shape_cast %30 : vector<16x32xbf16> to vector<2x8x32xbf16>
    "tpu.trace_start"() <{level = 10 : i32, message = "btd,bsd->bts"}> : () -> ()
    %cst_8 = arith.constant dense<0.000000e+00> : vector<2x8x8xf32>
    %32 = tpu.matmul %27, %29, %cst_8 {dimension_numbers = #tpu.dot_dimension_numbers<[2], [2], [1], [1], [0, 0, 0, 1, 1, 1], [0], [0]>} : vector<2x8x32xbf16>, vector<2x8x32xbf16>, vector<2x8x8xf32> -> vector<2x8x8xf32>
    "tpu.trace_stop"() : () -> ()
    %cst_9 = arith.constant dense<0xFF800000> : vector<2x8xf32>
    %33 = vector.multi_reduction <maximumf>, %32, %cst_9 [2] : vector<2x8x8xf32> to vector<2x8xf32>
    %34 = vector.shape_cast %33 : vector<2x8xf32> to vector<2x8x1xf32>
    %35 = vector.broadcast %34 : vector<2x8x1xf32> to vector<2x8x8xf32>
    %36 = arith.subf %32, %35 : vector<2x8x8xf32>
    %37 = math.exp %36 : vector<2x8x8xf32>
    %cst_10 = arith.constant dense<0.000000e+00> : vector<2x8xf32>
    %38 = vector.multi_reduction <add>, %37, %cst_10 [2] : vector<2x8x8xf32> to vector<2x8xf32>
    %39 = vector.shape_cast %38 : vector<2x8xf32> to vector<2x8x1xf32>
    %40 = tpu.reciprocal %39 {approx = true} : vector<2x8x1xf32> -> vector<2x8x1xf32>
    %41 = vector.broadcast %40 : vector<2x8x1xf32> to vector<2x8x8xf32>
    %42 = arith.mulf %37, %41 : vector<2x8x8xf32>
    %43 = arith.truncf %42 : vector<2x8x8xf32> to vector<2x8x8xbf16>
    "tpu.trace_start"() <{level = 10 : i32, message = "bts,bsd->btd"}> : () -> ()
    %cst_11 = arith.constant dense<0.000000e+00> : vector<2x8x32xf32>
    %44 = tpu.matmul %43, %31, %cst_11 {dimension_numbers = #tpu.dot_dimension_numbers<[2], [1], [1], [2], [0, 0, 0, 1, 1, 2], [0], [0]>} : vector<2x8x8xbf16>, vector<2x8x32xbf16>, vector<2x8x32xf32> -> vector<2x8x32xf32>
    "tpu.trace_stop"() : () -> ()
    %45 = arith.truncf %44 : vector<2x8x32xf32> to vector<2x8x32xbf16>
    %46 = vector.extract_strided_slice %5 {offsets = [0, 64], sizes = [16, 32], strides = [1, 1]} : vector<16x384xbf16> to vector<16x32xbf16>
    %47 = vector.shape_cast %46 : vector<16x32xbf16> to vector<2x8x32xbf16>
    %48 = vector.extract_strided_slice %5 {offsets = [0, 192], sizes = [16, 32], strides = [1, 1]} : vector<16x384xbf16> to vector<16x32xbf16>
    %49 = vector.shape_cast %48 : vector<16x32xbf16> to vector<2x8x32xbf16>
    %50 = vector.extract_strided_slice %5 {offsets = [0, 320], sizes = [16, 32], strides = [1, 1]} : vector<16x384xbf16> to vector<16x32xbf16>
    %51 = vector.shape_cast %50 : vector<16x32xbf16> to vector<2x8x32xbf16>
    "tpu.trace_start"() <{level = 10 : i32, message = "btd,bsd->bts"}> : () -> ()
    %cst_12 = arith.constant dense<0.000000e+00> : vector<2x8x8xf32>
    %52 = tpu.matmul %47, %49, %cst_12 {dimension_numbers = #tpu.dot_dimension_numbers<[2], [2], [1], [1], [0, 0, 0, 1, 1, 1], [0], [0]>} : vector<2x8x32xbf16>, vector<2x8x32xbf16>, vector<2x8x8xf32> -> vector<2x8x8xf32>
    "tpu.trace_stop"() : () -> ()
    %cst_13 = arith.constant dense<0xFF800000> : vector<2x8xf32>
    %53 = vector.multi_reduction <maximumf>, %52, %cst_13 [2] : vector<2x8x8xf32> to vector<2x8xf32>
    %54 = vector.shape_cast %53 : vector<2x8xf32> to vector<2x8x1xf32>
    %55 = vector.broadcast %54 : vector<2x8x1xf32> to vector<2x8x8xf32>
    %56 = arith.subf %52, %55 : vector<2x8x8xf32>
    %57 = math.exp %56 : vector<2x8x8xf32>
    %cst_14 = arith.constant dense<0.000000e+00> : vector<2x8xf32>
    %58 = vector.multi_reduction <add>, %57, %cst_14 [2] : vector<2x8x8xf32> to vector<2x8xf32>
    %59 = vector.shape_cast %58 : vector<2x8xf32> to vector<2x8x1xf32>
    %60 = tpu.reciprocal %59 {approx = true} : vector<2x8x1xf32> -> vector<2x8x1xf32>
    %61 = vector.broadcast %60 : vector<2x8x1xf32> to vector<2x8x8xf32>
    %62 = arith.mulf %57, %61 : vector<2x8x8xf32>
    %63 = arith.truncf %62 : vector<2x8x8xf32> to vector<2x8x8xbf16>
    "tpu.trace_start"() <{level = 10 : i32, message = "bts,bsd->btd"}> : () -> ()
    %cst_15 = arith.constant dense<0.000000e+00> : vector<2x8x32xf32>
    %64 = tpu.matmul %63, %51, %cst_15 {dimension_numbers = #tpu.dot_dimension_numbers<[2], [1], [1], [2], [0, 0, 0, 1, 1, 2], [0], [0]>} : vector<2x8x8xbf16>, vector<2x8x32xbf16>, vector<2x8x32xf32> -> vector<2x8x32xf32>
    "tpu.trace_stop"() : () -> ()
    %65 = arith.truncf %64 : vector<2x8x32xf32> to vector<2x8x32xbf16>
    %66 = vector.extract_strided_slice %5 {offsets = [0, 96], sizes = [16, 32], strides = [1, 1]} : vector<16x384xbf16> to vector<16x32xbf16>
    %67 = vector.shape_cast %66 : vector<16x32xbf16> to vector<2x8x32xbf16>
    %68 = vector.extract_strided_slice %5 {offsets = [0, 224], sizes = [16, 32], strides = [1, 1]} : vector<16x384xbf16> to vector<16x32xbf16>
    %69 = vector.shape_cast %68 : vector<16x32xbf16> to vector<2x8x32xbf16>
    %70 = vector.extract_strided_slice %5 {offsets = [0, 352], sizes = [16, 32], strides = [1, 1]} : vector<16x384xbf16> to vector<16x32xbf16>
    %71 = vector.shape_cast %70 : vector<16x32xbf16> to vector<2x8x32xbf16>
    "tpu.trace_start"() <{level = 10 : i32, message = "btd,bsd->bts"}> : () -> ()
    %cst_16 = arith.constant dense<0.000000e+00> : vector<2x8x8xf32>
    %72 = tpu.matmul %67, %69, %cst_16 {dimension_numbers = #tpu.dot_dimension_numbers<[2], [2], [1], [1], [0, 0, 0, 1, 1, 1], [0], [0]>} : vector<2x8x32xbf16>, vector<2x8x32xbf16>, vector<2x8x8xf32> -> vector<2x8x8xf32>
    "tpu.trace_stop"() : () -> ()
    %cst_17 = arith.constant dense<0xFF800000> : vector<2x8xf32>
    %73 = vector.multi_reduction <maximumf>, %72, %cst_17 [2] : vector<2x8x8xf32> to vector<2x8xf32>
    %74 = vector.shape_cast %73 : vector<2x8xf32> to vector<2x8x1xf32>
    %75 = vector.broadcast %74 : vector<2x8x1xf32> to vector<2x8x8xf32>
    %76 = arith.subf %72, %75 : vector<2x8x8xf32>
    %77 = math.exp %76 : vector<2x8x8xf32>
    %cst_18 = arith.constant dense<0.000000e+00> : vector<2x8xf32>
    %78 = vector.multi_reduction <add>, %77, %cst_18 [2] : vector<2x8x8xf32> to vector<2x8xf32>
    %79 = vector.shape_cast %78 : vector<2x8xf32> to vector<2x8x1xf32>
    %80 = tpu.reciprocal %79 {approx = true} : vector<2x8x1xf32> -> vector<2x8x1xf32>
    %81 = vector.broadcast %80 : vector<2x8x1xf32> to vector<2x8x8xf32>
    %82 = arith.mulf %77, %81 : vector<2x8x8xf32>
    %83 = arith.truncf %82 : vector<2x8x8xf32> to vector<2x8x8xbf16>
    "tpu.trace_start"() <{level = 10 : i32, message = "bts,bsd->btd"}> : () -> ()
    %cst_19 = arith.constant dense<0.000000e+00> : vector<2x8x32xf32>
    %84 = tpu.matmul %83, %71, %cst_19 {dimension_numbers = #tpu.dot_dimension_numbers<[2], [1], [1], [2], [0, 0, 0, 1, 1, 2], [0], [0]>} : vector<2x8x8xbf16>, vector<2x8x32xbf16>, vector<2x8x32xf32> -> vector<2x8x32xf32>
    "tpu.trace_stop"() : () -> ()
    %85 = arith.truncf %84 : vector<2x8x32xf32> to vector<2x8x32xbf16>
    %86 = tpu.concatenate %25, %45, %65, %85 in 2 : vector<2x8x32xbf16>, vector<2x8x32xbf16>, vector<2x8x32xbf16>, vector<2x8x32xbf16> -> vector<2x8x128xbf16>
    %87 = vector.shape_cast %86 : vector<2x8x128xbf16> to vector<16x128xbf16>
    %c0_20 = arith.constant 0 : index
    %c0_21 = arith.constant 0 : index
    %88 = vector.load %arg3[%c0_20, %c0_21] : memref<128x128xbf16, #tpu.memory_space<vmem>>, vector<128x128xbf16>
    %cst_22 = arith.constant dense<0.000000e+00> : vector<16x128xf32>
    %89 = tpu.matmul %87, %88, %cst_22 {dimension_numbers = #tpu.dot_dimension_numbers<[1], [0], [0], [1], [0, 0, 1, 1], [], []>} : vector<16x128xbf16>, vector<128x128xbf16>, vector<16x128xf32> -> vector<16x128xf32>
    %c0_23 = arith.constant 0 : index
    %c0_24 = arith.constant 0 : index
    %90 = vector.load %arg4[%c0_23, %c0_24] : memref<1x128xf32, #tpu.memory_space<vmem>>, vector<1x128xf32>
    %91 = vector.broadcast %90 : vector<1x128xf32> to vector<16x128xf32>
    %92 = arith.addf %89, %91 : vector<16x128xf32>
    %93 = vector.shape_cast %92 : vector<16x128xf32> to vector<2x8x128xf32>
    %c0_25 = arith.constant 0 : index
    %c0_26 = arith.constant 0 : index
    %c0_27 = arith.constant 0 : index
    %94 = vector.load %arg5[%c0_25, %c0_26, %c0_27] : memref<2x8x128xf32, #tpu.memory_space<vmem>>, vector<2x8x128xf32>
    tpu.vector_store %arg5[%c0_25, %c0_26, %c0_27], %93 {strides = array<i32>} : memref<2x8x128xf32, #tpu.memory_space<vmem>>, vector<2x8x128xf32>,
    return
  }
  func.func @transform_0(%arg0: i32) -> (i32, i32, i32) {
    %c0_i32 = arith.constant 0 : i32
    %c0_i32_0 = arith.constant 0 : i32
    %c0_i32_1 = arith.constant 0 : i32
    return %arg0, %c0_i32, %c0_i32_0 : i32, i32, i32
  }
  func.func @transform_1(%arg0: i32) -> (i32, i32) {
    %c0_i32 = arith.constant 0 : i32
    %c0_i32_0 = arith.constant 0 : i32
    %c0_i32_1 = arith.constant 0 : i32
    return %c0_i32, %c0_i32_0 : i32, i32
  }
  func.func @transform_2(%arg0: i32) -> (i32, i32) {
    %c0_i32 = arith.constant 0 : i32
    %c0_i32_0 = arith.constant 0 : i32
    %c0_i32_1 = arith.constant 0 : i32
    return %c0_i32, %c0_i32_0 : i32, i32
  }
  func.func @transform_3(%arg0: i32) -> (i32, i32) {
    %c0_i32 = arith.constant 0 : i32
    %c0_i32_0 = arith.constant 0 : i32
    %c0_i32_1 = arith.constant 0 : i32
    return %c0_i32, %c0_i32_0 : i32, i32
  }
  func.func @transform_4(%arg0: i32) -> (i32, i32, i32) {
    %c0_i32 = arith.constant 0 : i32
    %c0_i32_0 = arith.constant 0 : i32
    %c0_i32_1 = arith.constant 0 : i32
    return %arg0, %c0_i32, %c0_i32_0 : i32, i32, i32
  }
}

module attributes {stable_mosaic.version = 11 : i64} {
  func.func @_mha_kernel(%arg0: i32, %arg1: memref<2x8x128xf32, #tpu.memory_space<vmem>>, %arg2: memref<128x384xbf16, #tpu.memory_space<vmem>>, %arg3: memref<128x128xbf16, #tpu.memory_space<vmem>>, %arg4: memref<1x128xf32, #tpu.memory_space<vmem>>, %arg5: memref<2x8x128xf32, #tpu.memory_space<vmem>>) attributes {dimension_semantics = [#tpu.dimension_semantics<parallel>], iteration_bounds = array<i64: 1>, scalar_prefetch = 0 : i64, scratch_operands = 0 : i64, tpu.core_type = #tpu.core_type<tc>, window_params = [{transform_indices = @transform_0, window_bounds = array<i64: 2, 8, 128>}, {pipeline_mode = #tpu.pipeline_mode<synchronous>, transform_indices = @transform_1, window_bounds = array<i64: 128, 384>}, {pipeline_mode = #tpu.pipeline_mode<synchronous>, transform_indices = @transform_2, window_bounds = array<i64: 128, 128>}, {pipeline_mode = #tpu.pipeline_mode<synchronous>, transform_indices = @transform_3, window_bounds = array<i64: 1, 128>}, {transform_indices = @transform_4, window_bounds = array<i64: 2, 8, 128>}]} {
    %c0 = arith.constant 0 : index
    %c0_0 = arith.constant 0 : index
    %c0_1 = arith.constant 0 : index
    %0 = vector.load %arg1[%c0, %c0_0, %c0_1] : memref<2x8x128xf32, #tpu.memory_space<vmem>>, vector<2x8x128xf32>
    %1 = vector.shape_cast %0 : vector<2x8x128xf32> to vector<16x128xf32>
    %2 = arith.truncf %1 : vector<16x128xf32> to vector<16x128xbf16>
    %c0_2 = arith.constant 0 : index
    %c0_3 = arith.constant 0 : index
    %3 = vector.load %arg2[%c0_2, %c0_3] : memref<128x384xbf16, #tpu.memory_space<vmem>>, vector<128x384xbf16>
    %cst = arith.constant dense<0.000000e+00> : vector<16x384xf32>
    %4 = tpu.matmul %2, %3, %cst {dimension_numbers = #tpu.dot_dimension_numbers<[1], [0], [0], [1], [0, 0, 1, 1], [], []>} : vector<16x128xbf16>, vector<128x384xbf16>, vector<16x384xf32> -> vector<16x384xf32>
    %5 = arith.truncf %4 : vector<16x384xf32> to vector<16x384xbf16>
    %6 = vector.extract_strided_slice %5 {offsets = [0, 0], sizes = [16, 32], strides = [1, 1]} : vector<16x384xbf16> to vector<16x32xbf16>
    %7 = vector.shape_cast %6 : vector<16x32xbf16> to vector<2x8x32xbf16>
    %8 = vector.extract_strided_slice %5 {offsets = [0, 128], sizes = [16, 32], strides = [1, 1]} : vector<16x384xbf16> to vector<16x32xbf16>
    %9 = vector.shape_cast %8 : vector<16x32xbf16> to vector<2x8x32xbf16>
    %10 = vector.extract_strided_slice %5 {offsets = [0, 256], sizes = [16, 32], strides = [1, 1]} : vector<16x384xbf16> to vector<16x32xbf16>
    %11 = vector.shape_cast %10 : vector<16x32xbf16> to vector<2x8x32xbf16>
    "tpu.trace_start"() <{level = 10 : i32, message = "btd,bsd->bts"}> : () -> ()
    %cst_4 = arith.constant dense<0.000000e+00> : vector<2x8x8xf32>
    %12 = tpu.matmul %7, %9, %cst_4 {dimension_numbers = #tpu.dot_dimension_numbers<[2], [2], [1], [1], [0, 0, 0, 1, 1, 1], [0], [0]>} : vector<2x8x32xbf16>, vector<2x8x32xbf16>, vector<2x8x8xf32> -> vector<2x8x8xf32>
    "tpu.trace_stop"() : () -> ()
    %cst_5 = arith.constant dense<0xFF800000> : vector<2x8xf32>
    %13 = vector.multi_reduction <maximumf>, %12, %cst_5 [2] : vector<2x8x8xf32> to vector<2x8xf32>
    %14 = vector.shape_cast %13 : vector<2x8xf32> to vector<2x8x1xf32>
    %15 = vector.broadcast %14 : vector<2x8x1xf32> to vector<2x8x8xf32>
    %16 = arith.subf %12, %15 : vector<2x8x8xf32>
    %17 = math.exp %16 : vector<2x8x8xf32>
    %cst_6 = arith.constant dense<0.000000e+00> : vector<2x8xf32>
    %18 = vector.multi_reduction <add>, %17, %cst_6 [2] : vector<2x8x8xf32> to vector<2x8xf32>
    %19 = vector.shape_cast %18 : vector<2x8xf32> to vector<2x8x1xf32>
    %20 = tpu.reciprocal %19 {approx = true} : vector<2x8x1xf32> -> vector<2x8x1xf32>
    %21 = vector.broadcast %20 : vector<2x8x1xf32> to vector<2x8x8xf32>
    %22 = arith.mulf %17, %21 : vector<2x8x8xf32>
    %23 = arith.truncf %22 : vector<2x8x8xf32> to vector<2x8x8xbf16>
    "tpu.trace_start"() <{level = 10 : i32, message = "bts,bsd->btd"}> : () -> ()
    %cst_7 = arith.constant dense<0.000000e+00> : vector<2x8x32xf32>
    %24 = tpu.matmul %23, %11, %cst_7 {dimension_numbers = #tpu.dot_dimension_numbers<[2], [1], [1], [2], [0, 0, 0, 1, 1, 2], [0], [0]>} : vector<2x8x8xbf16>, vector<2x8x32xbf16>, vector<2x8x32xf32> -> vector<2x8x32xf32>
    "tpu.trace_stop"() : () -> ()
    %25 = arith.truncf %24 : vector<2x8x32xf32> to vector<2x8x32xbf16>
    %26 = vector.extract_strided_slice %5 {offsets = [0, 32], sizes = [16, 32], strides = [1, 1]} : vector<16x384xbf16> to vector<16x32xbf16>
    %27 = vector.shape_cast %26 : vector<16x32xbf16> to vector<2x8x32xbf16>
    %28 = vector.extract_strided_slice %5 {offsets = [0, 160], sizes = [16, 32], strides = [1, 1]} : vector<16x384xbf16> to vector<16x32xbf16>
    %29 = vector.shape_cast %28 : vector<16x32xbf16> to vector<2x8x32xbf16>
    %30 = vector.extract_strided_slice %5 {offsets = [0, 288], sizes = [16, 32], strides = [1, 1]} : vector<16x384xbf16> to vector<16x32xbf16>
    %31 = vector.shape_cast %30 : vector<16x32xbf16> to vector<2x8x32xbf16>
    "tpu.trace_start"() <{level = 10 : i32, message = "btd,bsd->bts"}> : () -> ()
    %cst_8 = arith.constant dense<0.000000e+00> : vector<2x8x8xf32>
    %32 = tpu.matmul %27, %29, %cst_8 {dimension_numbers = #tpu.dot_dimension_numbers<[2], [2], [1], [1], [0, 0, 0, 1, 1, 1], [0], [0]>} : vector<2x8x32xbf16>, vector<2x8x32xbf16>, vector<2x8x8xf32> -> vector<2x8x8xf32>
    "tpu.trace_stop"() : () -> ()
    %cst_9 = arith.constant dense<0xFF800000> : vector<2x8xf32>
    %33 = vector.multi_reduction <maximumf>, %32, %cst_9 [2] : vector<2x8x8xf32> to vector<2x8xf32>
    %34 = vector.shape_cast %33 : vector<2x8xf32> to vector<2x8x1xf32>
    %35 = vector.broadcast %34 : vector<2x8x1xf32> to vector<2x8x8xf32>
    %36 = arith.subf %32, %35 : vector<2x8x8xf32>
    %37 = math.exp %36 : vector<2x8x8xf32>
    %cst_10 = arith.constant dense<0.000000e+00> : vector<2x8xf32>
    %38 = vector.multi_reduction <add>, %37, %cst_10 [2] : vector<2x8x8xf32> to vector<2x8xf32>
    %39 = vector.shape_cast %38 : vector<2x8xf32> to vector<2x8x1xf32>
    %40 = tpu.reciprocal %39 {approx = true} : vector<2x8x1xf32> -> vector<2x8x1xf32>
    %41 = vector.broadcast %40 : vector<2x8x1xf32> to vector<2x8x8xf32>
    %42 = arith.mulf %37, %41 : vector<2x8x8xf32>
    %43 = arith.truncf %42 : vector<2x8x8xf32> to vector<2x8x8xbf16>
    "tpu.trace_start"() <{level = 10 : i32, message = "bts,bsd->btd"}> : () -> ()
    %cst_11 = arith.constant dense<0.000000e+00> : vector<2x8x32xf32>
    %44 = tpu.matmul %43, %31, %cst_11 {dimension_numbers = #tpu.dot_dimension_numbers<[2], [1], [1], [2], [0, 0, 0, 1, 1, 2], [0], [0]>} : vector<2x8x8xbf16>, vector<2x8x32xbf16>, vector<2x8x32xf32> -> vector<2x8x32xf32>
    "tpu.trace_stop"() : () -> ()
    %45 = arith.truncf %44 : vector<2x8x32xf32> to vector<2x8x32xbf16>
    %46 = vector.extract_strided_slice %5 {offsets = [0, 64], sizes = [16, 32], strides = [1, 1]} : vector<16x384xbf16> to vector<16x32xbf16>
    %47 = vector.shape_cast %46 : vector<16x32xbf16> to vector<2x8x32xbf16>
    %48 = vector.extract_strided_slice %5 {offsets = [0, 192], sizes = [16, 32], strides = [1, 1]} : vector<16x384xbf16> to vector<16x32xbf16>
    %49 = vector.shape_cast %48 : vector<16x32xbf16> to vector<2x8x32xbf16>
    %50 = vector.extract_strided_slice %5 {offsets = [0, 320], sizes = [16, 32], strides = [1, 1]} : vector<16x384xbf16> to vector<16x32xbf16>
    %51 = vector.shape_cast %50 : vector<16x32xbf16> to vector<2x8x32xbf16>
    "tpu.trace_start"() <{level = 10 : i32, message = "btd,bsd->bts"}> : () -> ()
    %cst_12 = arith.constant dense<0.000000e+00> : vector<2x8x8xf32>
    %52 = tpu.matmul %47, %49, %cst_12 {dimension_numbers = #tpu.dot_dimension_numbers<[2], [2], [1], [1], [0, 0, 0, 1, 1, 1], [0], [0]>} : vector<2x8x32xbf16>, vector<2x8x32xbf16>, vector<2x8x8xf32> -> vector<2x8x8xf32>
    "tpu.trace_stop"() : () -> ()
    %cst_13 = arith.constant dense<0xFF800000> : vector<2x8xf32>
    %53 = vector.multi_reduction <maximumf>, %52, %cst_13 [2] : vector<2x8x8xf32> to vector<2x8xf32>
    %54 = vector.shape_cast %53 : vector<2x8xf32> to vector<2x8x1xf32>
    %55 = vector.broadcast %54 : vector<2x8x1xf32> to vector<2x8x8xf32>
    %56 = arith.subf %52, %55 : vector<2x8x8xf32>
    %57 = math.exp %56 : vector<2x8x8xf32>
    %cst_14 = arith.constant dense<0.000000e+00> : vector<2x8xf32>
    %58 = vector.multi_reduction <add>, %57, %cst_14 [2] : vector<2x8x8xf32> to vector<2x8xf32>
    %59 = vector.shape_cast %58 : vector<2x8xf32> to vector<2x8x1xf32>
    %60 = tpu.reciprocal %59 {approx = true} : vector<2x8x1xf32> -> vector<2x8x1xf32>
    %61 = vector.broadcast %60 : vector<2x8x1xf32> to vector<2x8x8xf32>
    %62 = arith.mulf %57, %61 : vector<2x8x8xf32>
    %63 = arith.truncf %62 : vector<2x8x8xf32> to vector<2x8x8xbf16>
    "tpu.trace_start"() <{level = 10 : i32, message = "bts,bsd->btd"}> : () -> ()
    %cst_15 = arith.constant dense<0.000000e+00> : vector<2x8x32xf32>
    %64 = tpu.matmul %63, %51, %cst_15 {dimension_numbers = #tpu.dot_dimension_numbers<[2], [1], [1], [2], [0, 0, 0, 1, 1, 2], [0], [0]>} : vector<2x8x8xbf16>, vector<2x8x32xbf16>, vector<2x8x32xf32> -> vector<2x8x32xf32>
    "tpu.trace_stop"() : () -> ()
    %65 = arith.truncf %64 : vector<2x8x32xf32> to vector<2x8x32xbf16>
    %66 = vector.extract_strided_slice %5 {offsets = [0, 96], sizes = [16, 32], strides = [1, 1]} : vector<16x384xbf16> to vector<16x32xbf16>
    %67 = vector.shape_cast %66 : vector<16x32xbf16> to vector<2x8x32xbf16>
    %68 = vector.extract_strided_slice %5 {offsets = [0, 224], sizes = [16, 32], strides = [1, 1]} : vector<16x384xbf16> to vector<16x32xbf16>
    %69 = vector.shape_cast %68 : vector<16x32xbf16> to vector<2x8x32xbf16>
    %70 = vector.extract_strided_slice %5 {offsets = [0, 352], sizes = [16, 32], strides = [1, 1]} : vector<16x384xbf16> to vector<16x32xbf16>
    %71 = vector.shape_cast %70 : vector<16x32xbf16> to vector<2x8x32xbf16>
    "tpu.trace_start"() <{level = 10 : i32, message = "btd,bsd->bts"}> : () -> ()
    %cst_16 = arith.constant dense<0.000000e+00> : vector<2x8x8xf32>
    %72 = tpu.matmul %67, %69, %cst_16 {dimension_numbers = #tpu.dot_dimension_numbers<[2], [2], [1], [1], [0, 0, 0, 1, 1, 1], [0], [0]>} : vector<2x8x32xbf16>, vector<2x8x32xbf16>, vector<2x8x8xf32> -> vector<2x8x8xf32>
    "tpu.trace_stop"() : () -> ()
    %cst_17 = arith.constant dense<0xFF800000> : vector<2x8xf32>
    %73 = vector.multi_reduction <maximumf>, %72, %cst_17 [2] : vector<2x8x8xf32> to vector<2x8xf32>
    %74 = vector.shape_cast %73 : vector<2x8xf32> to vector<2x8x1xf32>
    %75 = vector.broadcast %74 : vector<2x8x1xf32> to vector<2x8x8xf32>
    %76 = arith.subf %72, %75 : vector<2x8x8xf32>
    %77 = math.exp %76 : vector<2x8x8xf32>
    %cst_18 = arith.constant dense<0.000000e+00> : vector<2x8xf32>
    %78 = vector.multi_reduction <add>, %77, %cst_18 [2] : vector<2x8x8xf32> to vector<2x8xf32>
    %79 = vector.shape_cast %78 : vector<2x8xf32> to vector<2x8x1xf32>
    %80 = tpu.reciprocal %79 {approx = true} : vector<2x8x1xf32> -> vector<2x8x1xf32>
    %81 = vector.broadcast %80 : vector<2x8x1xf32> to vector<2x8x8xf32>
    %82 = arith.mulf %77, %81 : vector<2x8x8xf32>
    %83 = arith.truncf %82 : vector<2x8x8xf32> to vector<2x8x8xbf16>
    "tpu.trace_start"() <{level = 10 : i32, message = "bts,bsd->btd"}> : () -> ()
    %cst_19 = arith.constant dense<0.000000e+00> : vector<2x8x32xf32>
    %84 = tpu.matmul %83, %71, %cst_19 {dimension_numbers = #tpu.dot_dimension_numbers<[2], [1], [1], [2], [0, 0, 0, 1, 1, 2], [0], [0]>} : vector<2x8x8xbf16>, vector<2x8x32xbf16>, vector<2x8x32xf32> -> vector<2x8x32xf32>
    "tpu.trace_stop"() : () -> ()
    %85 = arith.truncf %84 : vector<2x8x32xf32> to vector<2x8x32xbf16>
    %86 = tpu.concatenate %25, %45, %65, %85 in 2 : vector<2x8x32xbf16>, vector<2x8x32xbf16>, vector<2x8x32xbf16>, vector<2x8x32xbf16> -> vector<2x8x128xbf16>
    %87 = vector.shape_cast %86 : vector<2x8x128xbf16> to vector<16x128xbf16>
    %c0_20 = arith.constant 0 : index
    %c0_21 = arith.constant 0 : index
    %88 = vector.load %arg3[%c0_20, %c0_21] : memref<128x128xbf16, #tpu.memory_space<vmem>>, vector<128x128xbf16>
    %cst_22 = arith.constant dense<0.000000e+00> : vector<16x128xf32>
    %89 = tpu.matmul %87, %88, %cst_22 {dimension_numbers = #tpu.dot_dimension_numbers<[1], [0], [0], [1], [0, 0, 1, 1], [], []>} : vector<16x128xbf16>, vector<128x128xbf16>, vector<16x128xf32> -> vector<16x128xf32>
    %c0_23 = arith.constant 0 : index
    %c0_24 = arith.constant 0 : index
    %90 = vector.load %arg4[%c0_23, %c0_24] : memref<1x128xf32, #tpu.memory_space<vmem>>, vector<1x128xf32>
    %91 = vector.broadcast %90 : vector<1x128xf32> to vector<16x128xf32>
    %92 = arith.addf %89, %91 : vector<16x128xf32>
    %93 = vector.shape_cast %92 : vector<16x128xf32> to vector<2x8x128xf32>
    %c0_25 = arith.constant 0 : index
    %c0_26 = arith.constant 0 : index
    %c0_27 = arith.constant 0 : index
    %94 = vector.load %arg5[%c0_25, %c0_26, %c0_27] : memref<2x8x128xf32, #tpu.memory_space<vmem>>, vector<2x8x128xf32>
    tpu.vector_store %arg5[%c0_25, %c0_26, %c0_27], %93 {strides = array<i32>} : memref<2x8x128xf32, #tpu.memory_space<vmem>>, vector<2x8x128xf32>,
    return
  }
  func.func @transform_0(%arg0: i32) -> (i32, i32, i32) {
    %c0_i32 = arith.constant 0 : i32
    %c0_i32_0 = arith.constant 0 : i32
    %c0_i32_1 = arith.constant 0 : i32
    return %arg0, %c0_i32, %c0_i32_0 : i32, i32, i32
  }
  func.func @transform_1(%arg0: i32) -> (i32, i32) {
    %c0_i32 = arith.constant 0 : i32
    %c0_i32_0 = arith.constant 0 : i32
    %c0_i32_1 = arith.constant 0 : i32
    return %c0_i32, %c0_i32_0 : i32, i32
  }
  func.func @transform_2(%arg0: i32) -> (i32, i32) {
    %c0_i32 = arith.constant 0 : i32
    %c0_i32_0 = arith.constant 0 : i32
    %c0_i32_1 = arith.constant 0 : i32
    return %c0_i32, %c0_i32_0 : i32, i32
  }
  func.func @transform_3(%arg0: i32) -> (i32, i32) {
    %c0_i32 = arith.constant 0 : i32
    %c0_i32_0 = arith.constant 0 : i32
    %c0_i32_1 = arith.constant 0 : i32
    return %c0_i32, %c0_i32_0 : i32, i32
  }
  func.func @transform_4(%arg0: i32) -> (i32, i32, i32) {
    %c0_i32 = arith.constant 0 : i32
    %c0_i32_0 = arith.constant 0 : i32
    %c0_i32_1 = arith.constant 0 : i32
    return %arg0, %c0_i32, %c0_i32_0 : i32, i32, i32
  }
}

</mosaic_0001>

<llo_original>
// kernel: tpu_custom_call.1
$region0: #{tpu_custom_call.1}
  #allocation0 [shape = 'u32[]', space=smem, size = 0x4, offset = 0x4, fixed_abs, tag = 'smem constant byte address 0x4 - core index']
  #allocation1 [shape = 'u32[72,128]{1,0:T(1,128)}', space=vmem, size = 0x9000, scoped, tag = 'internal scratch']
  %s0 = inlined_call_operand.hbm [shape: f32[2,8,128], index: 0, kind: input, shape index: {}]
  %s1 = inlined_call_operand.hbm [shape: bf16[128,384], index: 1, kind: input, shape index: {}]
  %s2 = inlined_call_operand.hbm [shape: bf16[128,128], index: 2, kind: input, shape index: {}]
  %s3 = inlined_call_operand.vmem [shape: f32[1,128], index: 3, kind: input, shape index: {}]
  %s4 = inlined_call_operand.hbm [shape: f32[2,8,128], index: 4, kind: output, shape index: {}]
  %s5 = sld [smem:[#allocation0]]
  $region38: #{tpu_custom_call.1} parent=0
    _
  %s7 = ssub.s32 1, %s5
  %s8 = scalar_select 0, %s7, %s5
  $region1: #{tpu_custom_call.1} parent=0
    #allocation2 [shape = 'u8[8192]{0}', space=vmem, size = 0x2000, scoped, tag = 'input window, operand 0, single buffered']
    #allocation3 [shape = 's32[1]{0}', space=sflag, size = 0x4, scoped, tag = 'scoped memory for tpu_custom_call.1']
    #allocation4 [shape = 's32[1]{0}', space=sflag, size = 0x4, scoped, tag = 'scoped memory for tpu_custom_call.1']
    #allocation5 [shape = 'u8[98304]{0}', space=vmem, size = 0x18000, scoped, tag = 'input window, operand 1, single buffered']
    #allocation6 [shape = 's32[1]{0}', space=sflag, size = 0x4, scoped, tag = 'scoped memory for tpu_custom_call.1']
    #allocation7 [shape = 'u8[32768]{0}', space=vmem, size = 0x8000, scoped, tag = 'input window, operand 2, single buffered']
    #allocation8 [shape = 'u8[8192]{0}', space=vmem, size = 0x2000, scoped, tag = 'output window, operand 0, single buffered']
    %9 = vsyncpa [#allocation3], 0
    %10 = vsyncpa [#allocation6], 0
    %11 = vsyncpa [#allocation4], 0
    // Predicated region
    $region2: #{tpu_custom_call.1} parent=1 // pred_check
      _
    $region3: #{tpu_custom_call.1} parent=1 // pred_check_branch
      %13 = sbr.rel (0) target = $region5
    $region4: #{tpu_custom_call.1} parent=1 // pred_region
      %15 = vsyncadd [#allocation3], 0
      %s16 = sshll.u32 %s0, 4
      %s17 = int_to_ptr.hbm [resolvable:$true] %s16
      %s18 = sshll.u32 [#allocation2], 4
      %s19 = int_to_ptr.vmem [resolvable:$true] %s18
      %24 = dma.hbm_to_vmem [thread:$0]  %s17, 256, %s19, [#allocation3], 128, 128, 8
    $region5: #{tpu_custom_call.1} parent=1 // pred_fallthru
      _
    // Predicated region
    $region6: #{tpu_custom_call.1} parent=1 // pred_check
      _
    $region7: #{tpu_custom_call.1} parent=1 // pred_check_branch
      %26 = sbr.rel (0) target = $region9
    $region8: #{tpu_custom_call.1} parent=1 // pred_region
      %28 = vsyncadd [#allocation6], 0
      %s29 = sshll.u32 %s1, 4
      %s30 = int_to_ptr.hbm [resolvable:$true] %s29
      %s31 = sshll.u32 [#allocation5], 4
      %s32 = int_to_ptr.vmem [resolvable:$true] %s31
      %37 = dma.hbm_to_vmem [thread:$0]  %s30, 3072, %s32, [#allocation6], 192, 192, 12
    $region9: #{tpu_custom_call.1} parent=1 // pred_fallthru
      _
    // Predicated region
    $region10: #{tpu_custom_call.1} parent=1 // pred_check
      _
    $region11: #{tpu_custom_call.1} parent=1 // pred_check_branch
      %39 = sbr.rel (0) target = $region13
    $region12: #{tpu_custom_call.1} parent=1 // pred_region
      %41 = vsyncadd [#allocation6], 0
      %s42 = sshll.u32 %s2, 4
      %s43 = int_to_ptr.hbm [resolvable:$true] %s42
      %s44 = sshll.u32 [#allocation7], 4
      %s45 = int_to_ptr.vmem [resolvable:$true] %s44
      %50 = dma.hbm_to_vmem [thread:$0]  %s43, 1024, %s45, [#allocation6], 64, 64, 4
    $region13: #{tpu_custom_call.1} parent=1 // pred_fallthru
      _
    // Predicated region
    $region14: #{tpu_custom_call.1} parent=1 // pred_check
      _
    $region15: #{tpu_custom_call.1} parent=1 // pred_check_branch
      %52 = sbr.rel (0) target = $region17
    $region16: #{tpu_custom_call.1} parent=1 // pred_region
      _
    $region17: #{tpu_custom_call.1} parent=1 // pred_fallthru
      _
    // Predicated region
    $region18: #{tpu_custom_call.1} parent=1 // pred_check
      _
    $region19: #{tpu_custom_call.1} parent=1 // pred_check_branch
      %54 = sbr.rel (0) target = $region21
    $region20: #{tpu_custom_call.1} parent=1 // pred_region
      %56 = dma.done [#allocation3], 256
    $region21: #{tpu_custom_call.1} parent=1 // pred_fallthru
      _
    // Predicated region
    $region22: #{tpu_custom_call.1} parent=1 // pred_check
      _
    $region23: #{tpu_custom_call.1} parent=1 // pred_check_branch
      %58 = sbr.rel (0) target = $region25
    $region24: #{tpu_custom_call.1} parent=1 // pred_region
      %60 = dma.done [#allocation6], 3072
    $region25: #{tpu_custom_call.1} parent=1 // pred_fallthru
      _
    // Predicated region
    $region26: #{tpu_custom_call.1} parent=1 // pred_check
      _
    $region27: #{tpu_custom_call.1} parent=1 // pred_check_branch
      %62 = sbr.rel (0) target = $region29
    $region28: #{tpu_custom_call.1} parent=1 // pred_region
      %64 = dma.done [#allocation6], 1024
    $region29: #{tpu_custom_call.1} parent=1 // pred_fallthru
      _
    %v66 = vld [vmem:[#allocation2] sm:$0xff]
    %v67 = vld [vmem:[#allocation2 + $0x8] sm:$0xff]
    %v68 = vpack.c.bf16 %v67, %v66
    %v69 = vld [vmem:[#allocation5] sm:$0xff]
    %v70 = vld [vmem:[#allocation5 + $0x8] sm:$0xf]
    %v71 = vld [vmem:[#allocation5 + $0xc] sm:$0xff]
    %v72 = vld [vmem:[#allocation5 + $0x14] sm:$0xf]
    %v73 = vld [vmem:[#allocation5 + $0x18] sm:$0xff]
    %v74 = vld [vmem:[#allocation5 + $0x20] sm:$0xf]
    %v75 = vld [vmem:[#allocation5 + $0x24] sm:$0xff]
    %v76 = vld [vmem:[#allocation5 + $0x2c] sm:$0xf]
    %v77 = vld [vmem:[#allocation5 + $0x30] sm:$0xff]
    %v78 = vld [vmem:[#allocation5 + $0x38] sm:$0xf]
    %v79 = vld [vmem:[#allocation5 + $0x3c] sm:$0xff]
    %v80 = vld [vmem:[#allocation5 + $0x44] sm:$0xf]
    %v81 = vld [vmem:[#allocation5 + $0x48] sm:$0xff]
    %v82 = vld [vmem:[#allocation5 + $0x50] sm:$0xf]
    %v83 = vld [vmem:[#allocation5 + $0x54] sm:$0xff]
    %v84 = vld [vmem:[#allocation5 + $0x5c] sm:$0xf]
    %v85 = vld [vmem:[#allocation5 + $0x60] sm:$0xff]
    %v86 = vld [vmem:[#allocation5 + $0x68] sm:$0xf]
    %v87 = vld [vmem:[#allocation5 + $0x6c] sm:$0xff]
    %v88 = vld [vmem:[#allocation5 + $0x74] sm:$0xf]
    %v89 = vld [vmem:[#allocation5 + $0x78] sm:$0xff]
    %v90 = vld [vmem:[#allocation5 + $0x80] sm:$0xf]
    %v91 = vld [vmem:[#allocation5 + $0x84] sm:$0xff]
    %v92 = vld [vmem:[#allocation5 + $0x8c] sm:$0xf]
    %v93 = vld [vmem:[#allocation5 + $0x90] sm:$0xff]
    %v94 = vld [vmem:[#allocation5 + $0x98] sm:$0xf]
    %v95 = vld [vmem:[#allocation5 + $0x9c] sm:$0xff]
    %v96 = vld [vmem:[#allocation5 + $0xa4] sm:$0xf]
    %v97 = vld [vmem:[#allocation5 + $0xa8] sm:$0xff]
    %v98 = vld [vmem:[#allocation5 + $0xb0] sm:$0xf]
    %v99 = vld [vmem:[#allocation5 + $0xb4] sm:$0xff]
    %v100 = vld [vmem:[#allocation5 + $0xbc] sm:$0xf]
    %v133 = vunpack.c.l.b16 %v69
    %v134 = vunpack.c.h.b16 %v69
    %v135 = vunpack.c.l.b16 %v70
    %v136 = vunpack.c.l.b16 %v71
    %v137 = vunpack.c.h.b16 %v71
    %v138 = vunpack.c.l.b16 %v72
    %v139 = vunpack.c.l.b16 %v73
    %v140 = vunpack.c.h.b16 %v73
    %v141 = vunpack.c.l.b16 %v74
    %v142 = vunpack.c.l.b16 %v75
    %v143 = vunpack.c.h.b16 %v75
    %v144 = vunpack.c.l.b16 %v76
    %v145 = vunpack.c.l.b16 %v77
    %v146 = vunpack.c.h.b16 %v77
    %v147 = vunpack.c.l.b16 %v78
    %v148 = vunpack.c.l.b16 %v79
    %v149 = vunpack.c.h.b16 %v79
    %v150 = vunpack.c.l.b16 %v80
    %v151 = vunpack.c.l.b16 %v81
    %v152 = vunpack.c.h.b16 %v81
    %v153 = vunpack.c.l.b16 %v82
    %v154 = vunpack.c.l.b16 %v83
    %v155 = vunpack.c.h.b16 %v83
    %v156 = vunpack.c.l.b16 %v84
    %v157 = vunpack.c.l.b16 %v85
    %v158 = vunpack.c.h.b16 %v85
    %v159 = vunpack.c.l.b16 %v86
    %v160 = vunpack.c.l.b16 %v87
    %v161 = vunpack.c.h.b16 %v87
    %v162 = vunpack.c.l.b16 %v88
    %v163 = vunpack.c.l.b16 %v89
    %v164 = vunpack.c.h.b16 %v89
    %v165 = vunpack.c.l.b16 %v90
    %v166 = vunpack.c.l.b16 %v91
    %v167 = vunpack.c.h.b16 %v91
    %v168 = vunpack.c.l.b16 %v92
    %v169 = vunpack.c.l.b16 %v93
    %v170 = vunpack.c.h.b16 %v93
    %v171 = vunpack.c.l.b16 %v94
    %v172 = vunpack.c.l.b16 %v95
    %v173 = vunpack.c.h.b16 %v95
    %v174 = vunpack.c.l.b16 %v96
    %v175 = vunpack.c.l.b16 %v97
    %v176 = vunpack.c.h.b16 %v97
    %v177 = vunpack.c.l.b16 %v98
    %v178 = vunpack.c.l.b16 %v99
    %v179 = vunpack.c.h.b16 %v99
    %v180 = vunpack.c.l.b16 %v100
    %v181 = vpack.c.b16 %v136, %v133
    %v182 = vpack.c.b16 %v137, %v134
    %v183 = vpack.c.b16 %v138, %v135
    %v184 = vpack.c.b16 %v142, %v139
    %v185 = vpack.c.b16 %v143, %v140
    %v186 = vpack.c.b16 %v144, %v141
    %v187 = vpack.c.b16 %v148, %v145
    %v188 = vpack.c.b16 %v149, %v146
    %v189 = vpack.c.b16 %v150, %v147
    %v190 = vpack.c.b16 %v154, %v151
    %v191 = vpack.c.b16 %v155, %v152
    %v192 = vpack.c.b16 %v156, %v153
    %v193 = vpack.c.b16 %v160, %v157
    %v194 = vpack.c.b16 %v161, %v158
    %v195 = vpack.c.b16 %v162, %v159
    %v196 = vpack.c.b16 %v166, %v163
    %v197 = vpack.c.b16 %v167, %v164
    %v198 = vpack.c.b16 %v168, %v165
    %v199 = vpack.c.b16 %v172, %v169
    %v200 = vpack.c.b16 %v173, %v170
    %v201 = vpack.c.b16 %v174, %v171
    %v202 = vpack.c.b16 %v178, %v175
    %v203 = vpack.c.b16 %v179, %v176
    %v204 = vpack.c.b16 %v180, %v177
    %229 = vmatpush.bf16.msra.mxu0 %v202
    %230 = vmatpush.bf16.msra.mxu0 %v199
    %231 = vmatpush.bf16.msra.mxu0 %v196
    %232 = vmatpush.bf16.msra.mxu0 %v193
    %233 = vmatpush.bf16.msra.mxu0 %v190
    %234 = vmatpush.bf16.msra.mxu0 %v187
    %235 = vmatpush.bf16.msra.mxu0 %v184
    %236 = vmatpush.bf16.msra.mxu0 %v181
    %237 = vmatmul.bf16.gmra.mxu0 %v68
    %v238 = vpop.f32.mrf.mxu0
    %v239 = vadd.f32 0.0, %v238
    %v240 = vpop.f32.mrf.mxu0
    %v241 = vadd.f32 0.0, %v240
    %242 = vdwg.mxu0
    %243 = vmatpush.bf16.msra.mxu0 %v203
    %244 = vmatpush.bf16.msra.mxu0 %v200
    %245 = vmatpush.bf16.msra.mxu0 %v197
    %246 = vmatpush.bf16.msra.mxu0 %v194
    %247 = vmatpush.bf16.msra.mxu0 %v191
    %248 = vmatpush.bf16.msra.mxu0 %v188
    %249 = vmatpush.bf16.msra.mxu0 %v185
    %250 = vmatpush.bf16.msra.mxu0 %v182
    %251 = vmatmul.bf16.gmra.mxu0 %v68
    %v252 = vpop.f32.mrf.mxu0
    %v253 = vadd.f32 0.0, %v252
    %v254 = vpop.f32.mrf.mxu0
    %v255 = vadd.f32 0.0, %v254
    %256 = vdwg.mxu0
    %257 = vmatpush.bf16.msra.mxu0 %v204
    %258 = vmatpush.bf16.msra.mxu0 %v201
    %259 = vmatpush.bf16.msra.mxu0 %v198
    %260 = vmatpush.bf16.msra.mxu0 %v195
    %261 = vmatpush.bf16.msra.mxu0 %v192
    %262 = vmatpush.bf16.msra.mxu0 %v189
    %263 = vmatpush.bf16.msra.mxu0 %v186
    %264 = vmatpush.bf16.msra.mxu0 %v183
    %265 = vmatmul.bf16.gmra.mxu0 %v68
    %v266 = vpop.f32.mrf.mxu0
    %v267 = vadd.f32 0.0, %v266
    %v268 = vpop.f32.mrf.mxu0
    %v269 = vadd.f32 0.0, %v268
    %270 = vdwg.mxu0
    %v271 = vpack.c.bf16 %v253, %v239
    %v272 = vpack.c.bf16 %v267, %v267
    %v273 = vpack.c.bf16 %v255, %v241
    %v274 = vpack.c.bf16 %v269, %v269
    %v277 = vrot.slane %v271, 4
    %v278 = vrot.slane %v273, 4
    %vm279 = vcmask 261120
    %v281 = vsel %vm279, %v271, 0
    %v284 = vsel %vm279, %v277, 0
    %286 = vmatpush.bf16.xpose.msra.mxu0 0
    %287 = vmatpush.bf16.xpose.msra.mxu0 0
    %288 = vmatpush.bf16.xpose.msra.mxu0 0
    %289 = vmatpush.bf16.xpose.msra.mxu0 0
    %290 = vmatpush.bf16.xpose.msra.mxu0 0
    %291 = vmatpush.bf16.xpose.msra.mxu0 0
    %292 = vmatpush.bf16.xpose.msra.mxu0 0
    %293 = vmatpush.bf16.xpose.msra.mxu0 %v284
    %294 = vmatmul.bf16.gmra.mxu0 %v281
    %v295 = vpop.f32.mrf.mxu0
    %v296 = vadd.f32 0.0, %v295
    %v297 = vpop.f32.mrf.mxu0
    %298 = vdwg.mxu0
    %v300 = vsel %vm279, %v273, 0
    %v303 = vsel %vm279, %v278, 0
    %305 = vmatpush.bf16.xpose.msra.mxu0 0
    %306 = vmatpush.bf16.xpose.msra.mxu0 0
    %307 = vmatpush.bf16.xpose.msra.mxu0 0
    %308 = vmatpush.bf16.xpose.msra.mxu0 0
    %309 = vmatpush.bf16.xpose.msra.mxu0 0
    %310 = vmatpush.bf16.xpose.msra.mxu0 0
    %311 = vmatpush.bf16.xpose.msra.mxu0 0
    %312 = vmatpush.bf16.xpose.msra.mxu0 %v303
    %313 = vmatmul.bf16.gmra.mxu0 %v300
    %v314 = vpop.f32.mrf.mxu0
    %v315 = vadd.f32 0.0, %v314
    %v316 = vpop.f32.mrf.mxu0
    %317 = vdwg.mxu0
    %vm318 = vcmask 64512
    %v319 = vsel %vm318, %v296, -inf
    %320 = vmax.xlane.f32.xlu0 %v319
    %v321 = vpop.xlane.xlu0 %320
    %v322 = vsel %vm318, %v315, -inf
    %323 = vmax.xlane.f32.xlu0 %v322
    %v324 = vpop.xlane.xlu0 %323
    %v325 = vsub.f32 %v296, %v321
    %v326 = vsub.f32 %v315, %v324
    %v327 = vmul.f32 %v325, 1.442695
    %v328 = vpow.pop %v327
    %v329 = vmul.f32 %v326, 1.442695
    %v330 = vpow.pop %v329
    %v331 = vsel %vm318, %v328, 0.0
    %332 = vadd.xlane.f32.xlu0 %v331
    %v333 = vpop.xlane.xlu0 %332
    %v334 = vsel %vm318, %v330, 0.0
    %335 = vadd.xlane.f32.xlu0 %v334
    %v336 = vpop.xlane.xlu0 %335
    %v337 = vrcp.pop %v333
    %v338 = vrcp.pop %v336
    %v339 = vmul.f32 %v328, %v337
    %v340 = vmul.f32 %v330, %v338
    %v341 = vpack.c.bf16 %v339, %v339
    %v342 = vpack.c.bf16 %v340, %v340
    %v344 = vsel %vm318, %v341, 0
    %vm346 = vcmask 1043456
    %v348 = vsel %vm346, %v272, 0
    %350 = vmatpush.bf16.msra.mxu0 0
    %351 = vmatpush.bf16.msra.mxu0 0
    %352 = vmatpush.bf16.msra.mxu0 0
    %353 = vmatpush.bf16.msra.mxu0 0
    %354 = vmatpush.bf16.msra.mxu0 0
    %355 = vmatpush.bf16.msra.mxu0 0
    %356 = vmatpush.bf16.msra.mxu0 0
    %357 = vmatpush.bf16.msra.mxu0 %v348
    %358 = vmatmul.bf16.gmra.mxu0 %v344
    %v359 = vpop.f32.mrf.mxu0
    %v360 = vadd.f32 0.0, %v359
    %v361 = vpop.f32.mrf.mxu0
    %362 = vdwg.mxu0
    %v364 = vsel %vm318, %v342, 0
    %v367 = vsel %vm346, %v274, 0
    %369 = vmatpush.bf16.msra.mxu0 0
    %370 = vmatpush.bf16.msra.mxu0 0
    %371 = vmatpush.bf16.msra.mxu0 0
    %372 = vmatpush.bf16.msra.mxu0 0
    %373 = vmatpush.bf16.msra.mxu0 0
    %374 = vmatpush.bf16.msra.mxu0 0
    %375 = vmatpush.bf16.msra.mxu0 0
    %376 = vmatpush.bf16.msra.mxu0 %v367
    %377 = vmatmul.bf16.gmra.mxu0 %v364
    %v378 = vpop.f32.mrf.mxu0
    %v379 = vadd.f32 0.0, %v378
    %v380 = vpop.f32.mrf.mxu0
    %381 = vdwg.mxu0
    %v382 = vpack.c.bf16 %v360, %v360
    %v383 = vpack.c.bf16 %v379, %v379
    %384 = vrot.lane.b32.xlu0 %v271, 96
    %v385 = vpop.permute.xlu0 %384
    %386 = vrot.lane.b32.xlu0 %v273, 96
    %v387 = vpop.permute.xlu0 %386
    %v388 = vrot.slane %v385, 4
    %v389 = vrot.slane %v387, 4
    %v390 = vunpack.c.l.b16 %v271
    %v391 = vpack.c.b16 %v390, %v390
    %392 = vrot.lane.b32.xlu0 %v391, 96
    %v393 = vpop.permute.xlu0 %392
    %v395 = vsel %vm279, %v393, 0
    %v398 = vsel %vm279, %v388, 0
    %400 = vmatpush.bf16.xpose.msra.mxu0 0
    %401 = vmatpush.bf16.xpose.msra.mxu0 0
    %402 = vmatpush.bf16.xpose.msra.mxu0 0
    %403 = vmatpush.bf16.xpose.msra.mxu0 0
    %404 = vmatpush.bf16.xpose.msra.mxu0 0
    %405 = vmatpush.bf16.xpose.msra.mxu0 0
    %406 = vmatpush.bf16.xpose.msra.mxu0 0
    %407 = vmatpush.bf16.xpose.msra.mxu0 %v398
    %408 = vmatmul.bf16.gmra.mxu0 %v395
    %v409 = vpop.f32.mrf.mxu0
    %v410 = vadd.f32 0.0, %v409
    %v411 = vpop.f32.mrf.mxu0
    %412 = vdwg.mxu0
    %v413 = vunpack.c.l.b16 %v273
    %v414 = vpack.c.b16 %v413, %v413
    %415 = vrot.lane.b32.xlu0 %v414, 96
    %v416 = vpop.permute.xlu0 %415
    %v418 = vsel %vm279, %v416, 0
    %v421 = vsel %vm279, %v389, 0
    %423 = vmatpush.bf16.xpose.msra.mxu0 0
    %424 = vmatpush.bf16.xpose.msra.mxu0 0
    %425 = vmatpush.bf16.xpose.msra.mxu0 0
    %426 = vmatpush.bf16.xpose.msra.mxu0 0
    %427 = vmatpush.bf16.xpose.msra.mxu0 0
    %428 = vmatpush.bf16.xpose.msra.mxu0 0
    %429 = vmatpush.bf16.xpose.msra.mxu0 0
    %430 = vmatpush.bf16.xpose.msra.mxu0 %v421
    %431 = vmatmul.bf16.gmra.mxu0 %v418
    %v432 = vpop.f32.mrf.mxu0
    %v433 = vadd.f32 0.0, %v432
    %v434 = vpop.f32.mrf.mxu0
    %435 = vdwg.mxu0
    %v436 = vsel %vm318, %v410, -inf
    %437 = vmax.xlane.f32.xlu0 %v436
    %v438 = vpop.xlane.xlu0 %437
    %v439 = vsel %vm318, %v433, -inf
    %440 = vmax.xlane.f32.xlu0 %v439
    %v441 = vpop.xlane.xlu0 %440
    %v442 = vsub.f32 %v410, %v438
    %v443 = vsub.f32 %v433, %v441
    %v444 = vmul.f32 %v442, 1.442695
    %v445 = vpow.pop %v444
    %v446 = vmul.f32 %v443, 1.442695
    %v447 = vpow.pop %v446
    %v448 = vsel %vm318, %v445, 0.0
    %449 = vadd.xlane.f32.xlu0 %v448
    %v450 = vpop.xlane.xlu0 %449
    %v451 = vsel %vm318, %v447, 0.0
    %452 = vadd.xlane.f32.xlu0 %v451
    %v453 = vpop.xlane.xlu0 %452
    %v454 = vrcp.pop %v450
    %v455 = vrcp.pop %v453
    %v456 = vmul.f32 %v445, %v454
    %v457 = vmul.f32 %v447, %v455
    %v458 = vpack.c.bf16 %v456, %v456
    %v459 = vpack.c.bf16 %v457, %v457
    %v461 = vunpack.c.l.b16 %v272
    %v462 = vpack.c.b16 %v461, %v461
    %463 = vrot.lane.b32.xlu0 %v462, 96
    %v464 = vpop.permute.xlu0 %463
    %v466 = vsel %vm318, %v458, 0
    %v469 = vsel %vm346, %v464, 0
    %471 = vmatpush.bf16.msra.mxu0 0
    %472 = vmatpush.bf16.msra.mxu0 0
    %473 = vmatpush.bf16.msra.mxu0 0
    %474 = vmatpush.bf16.msra.mxu0 0
    %475 = vmatpush.bf16.msra.mxu0 0
    %476 = vmatpush.bf16.msra.mxu0 0
    %477 = vmatpush.bf16.msra.mxu0 0
    %478 = vmatpush.bf16.msra.mxu0 %v469
    %479 = vmatmul.bf16.gmra.mxu0 %v466
    %v480 = vpop.f32.mrf.mxu0
    %v481 = vadd.f32 0.0, %v480
    %v482 = vpop.f32.mrf.mxu0
    %483 = vdwg.mxu0
    %v485 = vunpack.c.l.b16 %v274
    %v486 = vpack.c.b16 %v485, %v485
    %487 = vrot.lane.b32.xlu0 %v486, 96
    %v488 = vpop.permute.xlu0 %487
    %v490 = vsel %vm318, %v459, 0
    %v493 = vsel %vm346, %v488, 0
    %495 = vmatpush.bf16.msra.mxu0 0
    %496 = vmatpush.bf16.msra.mxu0 0
    %497 = vmatpush.bf16.msra.mxu0 0
    %498 = vmatpush.bf16.msra.mxu0 0
    %499 = vmatpush.bf16.msra.mxu0 0
    %500 = vmatpush.bf16.msra.mxu0 0
    %501 = vmatpush.bf16.msra.mxu0 0
    %502 = vmatpush.bf16.msra.mxu0 %v493
    %503 = vmatmul.bf16.gmra.mxu0 %v490
    %v504 = vpop.f32.mrf.mxu0
    %v505 = vadd.f32 0.0, %v504
    %v506 = vpop.f32.mrf.mxu0
    %507 = vdwg.mxu0
    %v508 = vpack.c.bf16 %v481, %v481
    %v509 = vpack.c.bf16 %v505, %v505
    %510 = vrot.lane.b32.xlu0 %v271, 64
    %v511 = vpop.permute.xlu0 %510
    %512 = vrot.lane.b32.xlu0 %v273, 64
    %v513 = vpop.permute.xlu0 %512
    %v514 = vrot.slane %v511, 4
    %v515 = vrot.slane %v513, 4
    %516 = vrot.lane.b32.xlu0 %v391, 64
    %v517 = vpop.permute.xlu0 %516
    %v519 = vsel %vm279, %v517, 0
    %v522 = vsel %vm279, %v514, 0
    %524 = vmatpush.bf16.xpose.msra.mxu0 0
    %525 = vmatpush.bf16.xpose.msra.mxu0 0
    %526 = vmatpush.bf16.xpose.msra.mxu0 0
    %527 = vmatpush.bf16.xpose.msra.mxu0 0
    %528 = vmatpush.bf16.xpose.msra.mxu0 0
    %529 = vmatpush.bf16.xpose.msra.mxu0 0
    %530 = vmatpush.bf16.xpose.msra.mxu0 0
    %531 = vmatpush.bf16.xpose.msra.mxu0 %v522
    %532 = vmatmul.bf16.gmra.mxu0 %v519
    %v533 = vpop.f32.mrf.mxu0
    %v534 = vadd.f32 0.0, %v533
    %v535 = vpop.f32.mrf.mxu0
    %536 = vdwg.mxu0
    %537 = vrot.lane.b32.xlu0 %v414, 64
    %v538 = vpop.permute.xlu0 %537
    %v540 = vsel %vm279, %v538, 0
    %v543 = vsel %vm279, %v515, 0
    %545 = vmatpush.bf16.xpose.msra.mxu0 0
    %546 = vmatpush.bf16.xpose.msra.mxu0 0
    %547 = vmatpush.bf16.xpose.msra.mxu0 0
    %548 = vmatpush.bf16.xpose.msra.mxu0 0
    %549 = vmatpush.bf16.xpose.msra.mxu0 0
    %550 = vmatpush.bf16.xpose.msra.mxu0 0
    %551 = vmatpush.bf16.xpose.msra.mxu0 0
    %552 = vmatpush.bf16.xpose.msra.mxu0 %v543
    %553 = vmatmul.bf16.gmra.mxu0 %v540
    %v554 = vpop.f32.mrf.mxu0
    %v555 = vadd.f32 0.0, %v554
    %v556 = vpop.f32.mrf.mxu0
    %557 = vdwg.mxu0
    %v558 = vsel %vm318, %v534, -inf
    %559 = vmax.xlane.f32.xlu0 %v558
    %v560 = vpop.xlane.xlu0 %559
    %v561 = vsel %vm318, %v555, -inf
    %562 = vmax.xlane.f32.xlu0 %v561
    %v563 = vpop.xlane.xlu0 %562
    %v564 = vsub.f32 %v534, %v560
    %v565 = vsub.f32 %v555, %v563
    %v566 = vmul.f32 %v564, 1.442695
    %v567 = vpow.pop %v566
    %v568 = vmul.f32 %v565, 1.442695
    %v569 = vpow.pop %v568
    %v570 = vsel %vm318, %v567, 0.0
    %571 = vadd.xlane.f32.xlu0 %v570
    %v572 = vpop.xlane.xlu0 %571
    %v573 = vsel %vm318, %v569, 0.0
    %574 = vadd.xlane.f32.xlu0 %v573
    %v575 = vpop.xlane.xlu0 %574
    %v576 = vrcp.pop %v572
    %v577 = vrcp.pop %v575
    %v578 = vmul.f32 %v567, %v576
    %v579 = vmul.f32 %v569, %v577
    %v580 = vpack.c.bf16 %v578, %v578
    %v581 = vpack.c.bf16 %v579, %v579
    %582 = vrot.lane.b32.xlu0 %v462, 64
    %v583 = vpop.permute.xlu0 %582
    %v585 = vsel %vm318, %v580, 0
    %v588 = vsel %vm346, %v583, 0
    %590 = vmatpush.bf16.msra.mxu0 0
    %591 = vmatpush.bf16.msra.mxu0 0
    %592 = vmatpush.bf16.msra.mxu0 0
    %593 = vmatpush.bf16.msra.mxu0 0
    %594 = vmatpush.bf16.msra.mxu0 0
    %595 = vmatpush.bf16.msra.mxu0 0
    %596 = vmatpush.bf16.msra.mxu0 0
    %597 = vmatpush.bf16.msra.mxu0 %v588
    %598 = vmatmul.bf16.gmra.mxu0 %v585
    %v599 = vpop.f32.mrf.mxu0
    %v600 = vadd.f32 0.0, %v599
    %v601 = vpop.f32.mrf.mxu0
    %602 = vdwg.mxu0
    %603 = vrot.lane.b32.xlu0 %v486, 64
    %v604 = vpop.permute.xlu0 %603
    %v606 = vsel %vm318, %v581, 0
    %v609 = vsel %vm346, %v604, 0
    %611 = vmatpush.bf16.msra.mxu0 0
    %612 = vmatpush.bf16.msra.mxu0 0
    %613 = vmatpush.bf16.msra.mxu0 0
    %614 = vmatpush.bf16.msra.mxu0 0
    %615 = vmatpush.bf16.msra.mxu0 0
    %616 = vmatpush.bf16.msra.mxu0 0
    %617 = vmatpush.bf16.msra.mxu0 0
    %618 = vmatpush.bf16.msra.mxu0 %v609
    %619 = vmatmul.bf16.gmra.mxu0 %v606
    %v620 = vpop.f32.mrf.mxu0
    %v621 = vadd.f32 0.0, %v620
    %v622 = vpop.f32.mrf.mxu0
    %623 = vdwg.mxu0
    %v624 = vpack.c.bf16 %v600, %v600
    %v625 = vpack.c.bf16 %v621, %v621
    %626 = vrot.lane.b32.xlu0 %v271, 32
    %v627 = vpop.permute.xlu0 %626
    %628 = vrot.lane.b32.xlu0 %v273, 32
    %v629 = vpop.permute.xlu0 %628
    %v630 = vrot.slane %v627, 4
    %v631 = vrot.slane %v629, 4
    %632 = vrot.lane.b32.xlu0 %v391, 32
    %v633 = vpop.permute.xlu0 %632
    %v635 = vsel %vm279, %v633, 0
    %v638 = vsel %vm279, %v630, 0
    %640 = vmatpush.bf16.xpose.msra.mxu0 0
    %641 = vmatpush.bf16.xpose.msra.mxu0 0
    %642 = vmatpush.bf16.xpose.msra.mxu0 0
    %643 = vmatpush.bf16.xpose.msra.mxu0 0
    %644 = vmatpush.bf16.xpose.msra.mxu0 0
    %645 = vmatpush.bf16.xpose.msra.mxu0 0
    %646 = vmatpush.bf16.xpose.msra.mxu0 0
    %647 = vmatpush.bf16.xpose.msra.mxu0 %v638
    %648 = vmatmul.bf16.gmra.mxu0 %v635
    %v649 = vpop.f32.mrf.mxu0
    %v650 = vadd.f32 0.0, %v649
    %v651 = vpop.f32.mrf.mxu0
    %652 = vdwg.mxu0
    %653 = vrot.lane.b32.xlu0 %v414, 32
    %v654 = vpop.permute.xlu0 %653
    %v656 = vsel %vm279, %v654, 0
    %v659 = vsel %vm279, %v631, 0
    %661 = vmatpush.bf16.xpose.msra.mxu0 0
    %662 = vmatpush.bf16.xpose.msra.mxu0 0
    %663 = vmatpush.bf16.xpose.msra.mxu0 0
    %664 = vmatpush.bf16.xpose.msra.mxu0 0
    %665 = vmatpush.bf16.xpose.msra.mxu0 0
    %666 = vmatpush.bf16.xpose.msra.mxu0 0
    %667 = vmatpush.bf16.xpose.msra.mxu0 0
    %668 = vmatpush.bf16.xpose.msra.mxu0 %v659
    %669 = vmatmul.bf16.gmra.mxu0 %v656
    %v670 = vpop.f32.mrf.mxu0
    %v671 = vadd.f32 0.0, %v670
    %v672 = vpop.f32.mrf.mxu0
    %673 = vdwg.mxu0
    %v674 = vsel %vm318, %v650, -inf
    %675 = vmax.xlane.f32.xlu0 %v674
    %v676 = vpop.xlane.xlu0 %675
    %v677 = vsel %vm318, %v671, -inf
    %678 = vmax.xlane.f32.xlu0 %v677
    %v679 = vpop.xlane.xlu0 %678
    %v680 = vsub.f32 %v650, %v676
    %v681 = vsub.f32 %v671, %v679
    %v682 = vmul.f32 %v680, 1.442695
    %v683 = vpow.pop %v682
    %v684 = vmul.f32 %v681, 1.442695
    %v685 = vpow.pop %v684
    %v686 = vsel %vm318, %v683, 0.0
    %687 = vadd.xlane.f32.xlu0 %v686
    %v688 = vpop.xlane.xlu0 %687
    %v689 = vsel %vm318, %v685, 0.0
    %690 = vadd.xlane.f32.xlu0 %v689
    %v691 = vpop.xlane.xlu0 %690
    %v692 = vrcp.pop %v688
    %v693 = vrcp.pop %v691
    %v694 = vmul.f32 %v683, %v692
    %v695 = vmul.f32 %v685, %v693
    %v696 = vpack.c.bf16 %v694, %v694
    %v697 = vpack.c.bf16 %v695, %v695
    %698 = vrot.lane.b32.xlu0 %v462, 32
    %v699 = vpop.permute.xlu0 %698
    %v701 = vsel %vm318, %v696, 0
    %v704 = vsel %vm346, %v699, 0
    %706 = vmatpush.bf16.msra.mxu0 0
    %707 = vmatpush.bf16.msra.mxu0 0
    %708 = vmatpush.bf16.msra.mxu0 0
    %709 = vmatpush.bf16.msra.mxu0 0
    %710 = vmatpush.bf16.msra.mxu0 0
    %711 = vmatpush.bf16.msra.mxu0 0
    %712 = vmatpush.bf16.msra.mxu0 0
    %713 = vmatpush.bf16.msra.mxu0 %v704
    %714 = vmatmul.bf16.gmra.mxu0 %v701
    %v715 = vpop.f32.mrf.mxu0
    %v716 = vadd.f32 0.0, %v715
    %v717 = vpop.f32.mrf.mxu0
    %718 = vdwg.mxu0
    %719 = vrot.lane.b32.xlu0 %v486, 32
    %v720 = vpop.permute.xlu0 %719
    %v722 = vsel %vm318, %v697, 0
    %v725 = vsel %vm346, %v720, 0
    %727 = vmatpush.bf16.msra.mxu0 0
    %728 = vmatpush.bf16.msra.mxu0 0
    %729 = vmatpush.bf16.msra.mxu0 0
    %730 = vmatpush.bf16.msra.mxu0 0
    %731 = vmatpush.bf16.msra.mxu0 0
    %732 = vmatpush.bf16.msra.mxu0 0
    %733 = vmatpush.bf16.msra.mxu0 0
    %734 = vmatpush.bf16.msra.mxu0 %v725
    %735 = vmatmul.bf16.gmra.mxu0 %v722
    %v736 = vpop.f32.mrf.mxu0
    %v737 = vadd.f32 0.0, %v736
    %v738 = vpop.f32.mrf.mxu0
    %739 = vdwg.mxu0
    %v740 = vpack.c.bf16 %v716, %v716
    %v741 = vpack.c.bf16 %v737, %v737
    %v744 = vunpack.c.l.b16 %v508
    %v745 = vunpack.c.l.b16 %v509
    %v746 = vpack.c.b16 %v744, %v744
    %v747 = vpack.c.b16 %v745, %v745
    %748 = vrot.lane.b32.xlu0 %v746, 32
    %v749 = vpop.permute.xlu0 %748
    %750 = vrot.lane.b32.xlu0 %v747, 32
    %v751 = vpop.permute.xlu0 %750
    %v754 = vunpack.c.l.b16 %v624
    %v755 = vunpack.c.l.b16 %v625
    %v756 = vpack.c.b16 %v754, %v754
    %v757 = vpack.c.b16 %v755, %v755
    %758 = vrot.lane.b32.xlu0 %v756, 64
    %v759 = vpop.permute.xlu0 %758
    %760 = vrot.lane.b32.xlu0 %v757, 64
    %v761 = vpop.permute.xlu0 %760
    %v764 = vunpack.c.l.b16 %v740
    %v765 = vunpack.c.l.b16 %v741
    %v766 = vpack.c.b16 %v764, %v764
    %v767 = vpack.c.b16 %v765, %v765
    %768 = vrot.lane.b32.xlu0 %v766, 96
    %v769 = vpop.permute.xlu0 %768
    %770 = vrot.lane.b32.xlu0 %v767, 96
    %v771 = vpop.permute.xlu0 %770
    %v774 = vsel %vm279, %v382, %v749
    %v777 = vsel %vm279, %v383, %v751
    %vm778 = vcmask 523264
    %v780 = vsel %vm778, %v774, %v759
    %v782 = vsel %vm778, %v777, %v761
    %vm783 = vcmask 785408
    %v785 = vsel %vm783, %v780, %v769
    %v787 = vsel %vm783, %v782, %v771
    %v788 = vld [vmem:[#allocation7] sm:$0xf]
    %v789 = vld [vmem:[#allocation7 + $0x4] sm:$0xf]
    %v790 = vld [vmem:[#allocation7 + $0x8] sm:$0xf]
    %v791 = vld [vmem:[#allocation7 + $0xc] sm:$0xf]
    %v792 = vld [vmem:[#allocation7 + $0x10] sm:$0xf]
    %v793 = vld [vmem:[#allocation7 + $0x14] sm:$0xf]
    %v794 = vld [vmem:[#allocation7 + $0x18] sm:$0xf]
    %v795 = vld [vmem:[#allocation7 + $0x1c] sm:$0xf]
    %v796 = vld [vmem:[#allocation7 + $0x20] sm:$0xf]
    %v797 = vld [vmem:[#allocation7 + $0x24] sm:$0xf]
    %v798 = vld [vmem:[#allocation7 + $0x28] sm:$0xf]
    %v799 = vld [vmem:[#allocation7 + $0x2c] sm:$0xf]
    %v800 = vld [vmem:[#allocation7 + $0x30] sm:$0xf]
    %v801 = vld [vmem:[#allocation7 + $0x34] sm:$0xf]
    %v802 = vld [vmem:[#allocation7 + $0x38] sm:$0xf]
    %v803 = vld [vmem:[#allocation7 + $0x3c] sm:$0xf]
    %v804 = vld [vmem:[%s3] sm:$0x1]
    %v806 = vperm.slane %v804, 0
    %v810 = vunpack.c.l.b16 %v785
    %v811 = vunpack.c.l.b16 %v787
    %v812 = vpack.c.b16 %v811, %v810
    %v830 = vunpack.c.l.b16 %v788
    %v831 = vunpack.c.l.b16 %v789
    %v832 = vunpack.c.l.b16 %v790
    %v833 = vunpack.c.l.b16 %v791
    %v834 = vunpack.c.l.b16 %v792
    %v835 = vunpack.c.l.b16 %v793
    %v836 = vunpack.c.l.b16 %v794
    %v837 = vunpack.c.l.b16 %v795
    %v838 = vunpack.c.l.b16 %v796
    %v839 = vunpack.c.l.b16 %v797
    %v840 = vunpack.c.l.b16 %v798
    %v841 = vunpack.c.l.b16 %v799
    %v842 = vunpack.c.l.b16 %v800
    %v843 = vunpack.c.l.b16 %v801
    %v844 = vunpack.c.l.b16 %v802
    %v845 = vunpack.c.l.b16 %v803
    %v846 = vpack.c.b16 %v831, %v830
    %v847 = vpack.c.b16 %v833, %v832
    %v848 = vpack.c.b16 %v835, %v834
    %v849 = vpack.c.b16 %v837, %v836
    %v850 = vpack.c.b16 %v839, %v838
    %v851 = vpack.c.b16 %v841, %v840
    %v852 = vpack.c.b16 %v843, %v842
    %v853 = vpack.c.b16 %v845, %v844
    %862 = vmatpush.bf16.msra.mxu0 %v853
    %863 = vmatpush.bf16.msra.mxu0 %v852
    %864 = vmatpush.bf16.msra.mxu0 %v851
    %865 = vmatpush.bf16.msra.mxu0 %v850
    %866 = vmatpush.bf16.msra.mxu0 %v849
    %867 = vmatpush.bf16.msra.mxu0 %v848
    %868 = vmatpush.bf16.msra.mxu0 %v847
    %869 = vmatpush.bf16.msra.mxu0 %v846
    %870 = vmatmul.bf16.gmra.mxu0 %v812
    %v871 = vpop.f32.mrf.mxu0
    %v872 = vadd.f32 %v806, %v871
    %v873 = vpop.f32.mrf.mxu0
    %v874 = vadd.f32 %v806, %v873
    %875 = vdwg.mxu0
    %876 = vst [vmem:[#allocation8] sm:$0xff] %v872
    %877 = vst [vmem:[#allocation8 + $0x8] sm:$0xff] %v874
    // Predicated region
    $region30: #{tpu_custom_call.1} parent=1 // pred_check
      _
    $region31: #{tpu_custom_call.1} parent=1 // pred_check_branch
      %879 = sbr.rel (0) target = $region33
    $region32: #{tpu_custom_call.1} parent=1 // pred_region
      %881 = vsyncadd [#allocation4], 0
      %s882 = sshll.u32 [#allocation8], 4
      %s883 = int_to_ptr.vmem [resolvable:$true] %s882
      %s884 = sshll.u32 %s4, 4
      %s885 = int_to_ptr.hbm [resolvable:$true] %s884
      %890 = dma.vmem_to_hbm [thread:$0]  %s883, 256, %s885, [#allocation4], 128, 128, 8
    $region33: #{tpu_custom_call.1} parent=1 // pred_fallthru
      _
    // Predicated region
    $region34: #{tpu_custom_call.1} parent=1 // pred_check
      _
    $region35: #{tpu_custom_call.1} parent=1 // pred_check_branch
      %892 = sbr.rel (0) target = $region37
    $region36: #{tpu_custom_call.1} parent=1 // pred_region
      %894 = dma.done [#allocation4], 256
    $region37: #{tpu_custom_call.1} parent=1 // pred_fallthru
      _
    %895 = vsyncpa [#allocation3], 1
    %896 = vsyncpa [#allocation6], 1
    %897 = vsyncpa [#allocation4], 1

// kernel: tpu_custom_call.1
$region0: #{tpu_custom_call.1}
  #allocation0 [shape = 'u32[]', space=smem, size = 0x4, offset = 0x4, fixed_abs, tag = 'smem constant byte address 0x4 - core index']
  #allocation1 [shape = 'u32[72,128]{1,0:T(1,128)}', space=vmem, size = 0x9000, scoped, tag = 'internal scratch']
  %s0 = inlined_call_operand.hbm [shape: f32[2,8,128], index: 0, kind: input, shape index: {}]
  %s1 = inlined_call_operand.hbm [shape: bf16[128,384], index: 1, kind: input, shape index: {}]
  %s2 = inlined_call_operand.hbm [shape: bf16[128,128], index: 2, kind: input, shape index: {}]
  %s3 = inlined_call_operand.vmem [shape: f32[1,128], index: 3, kind: input, shape index: {}]
  %s4 = inlined_call_operand.hbm [shape: f32[2,8,128], index: 4, kind: output, shape index: {}]
  %s5 = sld [smem:[#allocation0]]
  $region38: #{tpu_custom_call.1} parent=0
    _
  %s7 = ssub.s32 1, %s5
  %s8 = scalar_select 0, %s7, %s5
  $region1: #{tpu_custom_call.1} parent=0
    #allocation2 [shape = 'u8[8192]{0}', space=vmem, size = 0x2000, scoped, tag = 'input window, operand 0, single buffered']
    #allocation3 [shape = 's32[1]{0}', space=sflag, size = 0x4, scoped, tag = 'scoped memory for tpu_custom_call.1']
    #allocation4 [shape = 's32[1]{0}', space=sflag, size = 0x4, scoped, tag = 'scoped memory for tpu_custom_call.1']
    #allocation5 [shape = 'u8[98304]{0}', space=vmem, size = 0x18000, scoped, tag = 'input window, operand 1, single buffered']
    #allocation6 [shape = 's32[1]{0}', space=sflag, size = 0x4, scoped, tag = 'scoped memory for tpu_custom_call.1']
    #allocation7 [shape = 'u8[32768]{0}', space=vmem, size = 0x8000, scoped, tag = 'input window, operand 2, single buffered']
    #allocation8 [shape = 'u8[8192]{0}', space=vmem, size = 0x2000, scoped, tag = 'output window, operand 0, single buffered']
    %9 = vsyncpa [#allocation3], 0
    %10 = vsyncpa [#allocation6], 0
    %11 = vsyncpa [#allocation4], 0
    // Predicated region
    $region2: #{tpu_custom_call.1} parent=1 // pred_check
      _
    $region3: #{tpu_custom_call.1} parent=1 // pred_check_branch
      %13 = sbr.rel (0) target = $region5
    $region4: #{tpu_custom_call.1} parent=1 // pred_region
      %15 = vsyncadd [#allocation3], 0
      %s16 = sshll.u32 %s0, 4
      %s17 = int_to_ptr.hbm [resolvable:$true] %s16
      %s18 = sshll.u32 [#allocation2], 4
      %s19 = int_to_ptr.vmem [resolvable:$true] %s18
      %24 = dma.hbm_to_vmem [thread:$0]  %s17, 256, %s19, [#allocation3], 128, 128, 8
    $region5: #{tpu_custom_call.1} parent=1 // pred_fallthru
      _
    // Predicated region
    $region6: #{tpu_custom_call.1} parent=1 // pred_check
      _
    $region7: #{tpu_custom_call.1} parent=1 // pred_check_branch
      %26 = sbr.rel (0) target = $region9
    $region8: #{tpu_custom_call.1} parent=1 // pred_region
      %28 = vsyncadd [#allocation6], 0
      %s29 = sshll.u32 %s1, 4
      %s30 = int_to_ptr.hbm [resolvable:$true] %s29
      %s31 = sshll.u32 [#allocation5], 4
      %s32 = int_to_ptr.vmem [resolvable:$true] %s31
      %37 = dma.hbm_to_vmem [thread:$0]  %s30, 3072, %s32, [#allocation6], 192, 192, 12
    $region9: #{tpu_custom_call.1} parent=1 // pred_fallthru
      _
    // Predicated region
    $region10: #{tpu_custom_call.1} parent=1 // pred_check
      _
    $region11: #{tpu_custom_call.1} parent=1 // pred_check_branch
      %39 = sbr.rel (0) target = $region13
    $region12: #{tpu_custom_call.1} parent=1 // pred_region
      %41 = vsyncadd [#allocation6], 0
      %s42 = sshll.u32 %s2, 4
      %s43 = int_to_ptr.hbm [resolvable:$true] %s42
      %s44 = sshll.u32 [#allocation7], 4
      %s45 = int_to_ptr.vmem [resolvable:$true] %s44
      %50 = dma.hbm_to_vmem [thread:$0]  %s43, 1024, %s45, [#allocation6], 64, 64, 4
    $region13: #{tpu_custom_call.1} parent=1 // pred_fallthru
      _
    // Predicated region
    $region14: #{tpu_custom_call.1} parent=1 // pred_check
      _
    $region15: #{tpu_custom_call.1} parent=1 // pred_check_branch
      %52 = sbr.rel (0) target = $region17
    $region16: #{tpu_custom_call.1} parent=1 // pred_region
      _
    $region17: #{tpu_custom_call.1} parent=1 // pred_fallthru
      _
    // Predicated region
    $region18: #{tpu_custom_call.1} parent=1 // pred_check
      _
    $region19: #{tpu_custom_call.1} parent=1 // pred_check_branch
      %54 = sbr.rel (0) target = $region21
    $region20: #{tpu_custom_call.1} parent=1 // pred_region
      %56 = dma.done [#allocation3], 256
    $region21: #{tpu_custom_call.1} parent=1 // pred_fallthru
      _
    // Predicated region
    $region22: #{tpu_custom_call.1} parent=1 // pred_check
      _
    $region23: #{tpu_custom_call.1} parent=1 // pred_check_branch
      %58 = sbr.rel (0) target = $region25
    $region24: #{tpu_custom_call.1} parent=1 // pred_region
      %60 = dma.done [#allocation6], 3072
    $region25: #{tpu_custom_call.1} parent=1 // pred_fallthru
      _
    // Predicated region
    $region26: #{tpu_custom_call.1} parent=1 // pred_check
      _
    $region27: #{tpu_custom_call.1} parent=1 // pred_check_branch
      %62 = sbr.rel (0) target = $region29
    $region28: #{tpu_custom_call.1} parent=1 // pred_region
      %64 = dma.done [#allocation6], 1024
    $region29: #{tpu_custom_call.1} parent=1 // pred_fallthru
      _
    %v66 = vld [vmem:[#allocation2] sm:$0xff]
    %v67 = vld [vmem:[#allocation2 + $0x8] sm:$0xff]
    %v68 = vpack.c.bf16 %v67, %v66
    %v69 = vld [vmem:[#allocation5] sm:$0xff]
    %v70 = vld [vmem:[#allocation5 + $0x8] sm:$0xf]
    %v71 = vld [vmem:[#allocation5 + $0xc] sm:$0xff]
    %v72 = vld [vmem:[#allocation5 + $0x14] sm:$0xf]
    %v73 = vld [vmem:[#allocation5 + $0x18] sm:$0xff]
    %v74 = vld [vmem:[#allocation5 + $0x20] sm:$0xf]
    %v75 = vld [vmem:[#allocation5 + $0x24] sm:$0xff]
    %v76 = vld [vmem:[#allocation5 + $0x2c] sm:$0xf]
    %v77 = vld [vmem:[#allocation5 + $0x30] sm:$0xff]
    %v78 = vld [vmem:[#allocation5 + $0x38] sm:$0xf]
    %v79 = vld [vmem:[#allocation5 + $0x3c] sm:$0xff]
    %v80 = vld [vmem:[#allocation5 + $0x44] sm:$0xf]
    %v81 = vld [vmem:[#allocation5 + $0x48] sm:$0xff]
    %v82 = vld [vmem:[#allocation5 + $0x50] sm:$0xf]
    %v83 = vld [vmem:[#allocation5 + $0x54] sm:$0xff]
    %v84 = vld [vmem:[#allocation5 + $0x5c] sm:$0xf]
    %v85 = vld [vmem:[#allocation5 + $0x60] sm:$0xff]
    %v86 = vld [vmem:[#allocation5 + $0x68] sm:$0xf]
    %v87 = vld [vmem:[#allocation5 + $0x6c] sm:$0xff]
    %v88 = vld [vmem:[#allocation5 + $0x74] sm:$0xf]
    %v89 = vld [vmem:[#allocation5 + $0x78] sm:$0xff]
    %v90 = vld [vmem:[#allocation5 + $0x80] sm:$0xf]
    %v91 = vld [vmem:[#allocation5 + $0x84] sm:$0xff]
    %v92 = vld [vmem:[#allocation5 + $0x8c] sm:$0xf]
    %v93 = vld [vmem:[#allocation5 + $0x90] sm:$0xff]
    %v94 = vld [vmem:[#allocation5 + $0x98] sm:$0xf]
    %v95 = vld [vmem:[#allocation5 + $0x9c] sm:$0xff]
    %v96 = vld [vmem:[#allocation5 + $0xa4] sm:$0xf]
    %v97 = vld [vmem:[#allocation5 + $0xa8] sm:$0xff]
    %v98 = vld [vmem:[#allocation5 + $0xb0] sm:$0xf]
    %v99 = vld [vmem:[#allocation5 + $0xb4] sm:$0xff]
    %v100 = vld [vmem:[#allocation5 + $0xbc] sm:$0xf]
    %v133 = vunpack.c.l.b16 %v69
    %v134 = vunpack.c.h.b16 %v69
    %v135 = vunpack.c.l.b16 %v70
    %v136 = vunpack.c.l.b16 %v71
    %v137 = vunpack.c.h.b16 %v71
    %v138 = vunpack.c.l.b16 %v72
    %v139 = vunpack.c.l.b16 %v73
    %v140 = vunpack.c.h.b16 %v73
    %v141 = vunpack.c.l.b16 %v74
    %v142 = vunpack.c.l.b16 %v75
    %v143 = vunpack.c.h.b16 %v75
    %v144 = vunpack.c.l.b16 %v76
    %v145 = vunpack.c.l.b16 %v77
    %v146 = vunpack.c.h.b16 %v77
    %v147 = vunpack.c.l.b16 %v78
    %v148 = vunpack.c.l.b16 %v79
    %v149 = vunpack.c.h.b16 %v79
    %v150 = vunpack.c.l.b16 %v80
    %v151 = vunpack.c.l.b16 %v81
    %v152 = vunpack.c.h.b16 %v81
    %v153 = vunpack.c.l.b16 %v82
    %v154 = vunpack.c.l.b16 %v83
    %v155 = vunpack.c.h.b16 %v83
    %v156 = vunpack.c.l.b16 %v84
    %v157 = vunpack.c.l.b16 %v85
    %v158 = vunpack.c.h.b16 %v85
    %v159 = vunpack.c.l.b16 %v86
    %v160 = vunpack.c.l.b16 %v87
    %v161 = vunpack.c.h.b16 %v87
    %v162 = vunpack.c.l.b16 %v88
    %v163 = vunpack.c.l.b16 %v89
    %v164 = vunpack.c.h.b16 %v89
    %v165 = vunpack.c.l.b16 %v90
    %v166 = vunpack.c.l.b16 %v91
    %v167 = vunpack.c.h.b16 %v91
    %v168 = vunpack.c.l.b16 %v92
    %v169 = vunpack.c.l.b16 %v93
    %v170 = vunpack.c.h.b16 %v93
    %v171 = vunpack.c.l.b16 %v94
    %v172 = vunpack.c.l.b16 %v95
    %v173 = vunpack.c.h.b16 %v95
    %v174 = vunpack.c.l.b16 %v96
    %v175 = vunpack.c.l.b16 %v97
    %v176 = vunpack.c.h.b16 %v97
    %v177 = vunpack.c.l.b16 %v98
    %v178 = vunpack.c.l.b16 %v99
    %v179 = vunpack.c.h.b16 %v99
    %v180 = vunpack.c.l.b16 %v100
    %v181 = vpack.c.b16 %v136, %v133
    %v182 = vpack.c.b16 %v137, %v134
    %v183 = vpack.c.b16 %v138, %v135
    %v184 = vpack.c.b16 %v142, %v139
    %v185 = vpack.c.b16 %v143, %v140
    %v186 = vpack.c.b16 %v144, %v141
    %v187 = vpack.c.b16 %v148, %v145
    %v188 = vpack.c.b16 %v149, %v146
    %v189 = vpack.c.b16 %v150, %v147
    %v190 = vpack.c.b16 %v154, %v151
    %v191 = vpack.c.b16 %v155, %v152
    %v192 = vpack.c.b16 %v156, %v153
    %v193 = vpack.c.b16 %v160, %v157
    %v194 = vpack.c.b16 %v161, %v158
    %v195 = vpack.c.b16 %v162, %v159
    %v196 = vpack.c.b16 %v166, %v163
    %v197 = vpack.c.b16 %v167, %v164
    %v198 = vpack.c.b16 %v168, %v165
    %v199 = vpack.c.b16 %v172, %v169
    %v200 = vpack.c.b16 %v173, %v170
    %v201 = vpack.c.b16 %v174, %v171
    %v202 = vpack.c.b16 %v178, %v175
    %v203 = vpack.c.b16 %v179, %v176
    %v204 = vpack.c.b16 %v180, %v177
    %229 = vmatpush.bf16.msra.mxu0 %v202
    %230 = vmatpush.bf16.msra.mxu0 %v199
    %231 = vmatpush.bf16.msra.mxu0 %v196
    %232 = vmatpush.bf16.msra.mxu0 %v193
    %233 = vmatpush.bf16.msra.mxu0 %v190
    %234 = vmatpush.bf16.msra.mxu0 %v187
    %235 = vmatpush.bf16.msra.mxu0 %v184
    %236 = vmatpush.bf16.msra.mxu0 %v181
    %237 = vmatmul.bf16.gmra.mxu0 %v68
    %v238 = vpop.f32.mrf.mxu0
    %v239 = vadd.f32 0.0, %v238
    %v240 = vpop.f32.mrf.mxu0
    %v241 = vadd.f32 0.0, %v240
    %242 = vdwg.mxu0
    %243 = vmatpush.bf16.msra.mxu0 %v203
    %244 = vmatpush.bf16.msra.mxu0 %v200
    %245 = vmatpush.bf16.msra.mxu0 %v197
    %246 = vmatpush.bf16.msra.mxu0 %v194
    %247 = vmatpush.bf16.msra.mxu0 %v191
    %248 = vmatpush.bf16.msra.mxu0 %v188
    %249 = vmatpush.bf16.msra.mxu0 %v185
    %250 = vmatpush.bf16.msra.mxu0 %v182
    %251 = vmatmul.bf16.gmra.mxu0 %v68
    %v252 = vpop.f32.mrf.mxu0
    %v253 = vadd.f32 0.0, %v252
    %v254 = vpop.f32.mrf.mxu0
    %v255 = vadd.f32 0.0, %v254
    %256 = vdwg.mxu0
    %257 = vmatpush.bf16.msra.mxu0 %v204
    %258 = vmatpush.bf16.msra.mxu0 %v201
    %259 = vmatpush.bf16.msra.mxu0 %v198
    %260 = vmatpush.bf16.msra.mxu0 %v195
    %261 = vmatpush.bf16.msra.mxu0 %v192
    %262 = vmatpush.bf16.msra.mxu0 %v189
    %263 = vmatpush.bf16.msra.mxu0 %v186
    %264 = vmatpush.bf16.msra.mxu0 %v183
    %265 = vmatmul.bf16.gmra.mxu0 %v68
    %v266 = vpop.f32.mrf.mxu0
    %v267 = vadd.f32 0.0, %v266
    %v268 = vpop.f32.mrf.mxu0
    %v269 = vadd.f32 0.0, %v268
    %270 = vdwg.mxu0
    %v271 = vpack.c.bf16 %v253, %v239
    %v272 = vpack.c.bf16 %v267, %v267
    %v273 = vpack.c.bf16 %v255, %v241
    %v274 = vpack.c.bf16 %v269, %v269
    %v277 = vrot.slane %v271, 4
    %v278 = vrot.slane %v273, 4
    %vm279 = vcmask 261120
    %v281 = vsel %vm279, %v271, 0
    %v284 = vsel %vm279, %v277, 0
    %286 = vmatpush.bf16.xpose.msra.mxu0 0
    %287 = vmatpush.bf16.xpose.msra.mxu0 0
    %288 = vmatpush.bf16.xpose.msra.mxu0 0
    %289 = vmatpush.bf16.xpose.msra.mxu0 0
    %290 = vmatpush.bf16.xpose.msra.mxu0 0
    %291 = vmatpush.bf16.xpose.msra.mxu0 0
    %292 = vmatpush.bf16.xpose.msra.mxu0 0
    %293 = vmatpush.bf16.xpose.msra.mxu0 %v284
    %294 = vmatmul.bf16.gmra.mxu0 %v281
    %v295 = vpop.f32.mrf.mxu0
    %v296 = vadd.f32 0.0, %v295
    %v297 = vpop.f32.mrf.mxu0
    %298 = vdwg.mxu0
    %v300 = vsel %vm279, %v273, 0
    %v303 = vsel %vm279, %v278, 0
    %305 = vmatpush.bf16.xpose.msra.mxu0 0
    %306 = vmatpush.bf16.xpose.msra.mxu0 0
    %307 = vmatpush.bf16.xpose.msra.mxu0 0
    %308 = vmatpush.bf16.xpose.msra.mxu0 0
    %309 = vmatpush.bf16.xpose.msra.mxu0 0
    %310 = vmatpush.bf16.xpose.msra.mxu0 0
    %311 = vmatpush.bf16.xpose.msra.mxu0 0
    %312 = vmatpush.bf16.xpose.msra.mxu0 %v303
    %313 = vmatmul.bf16.gmra.mxu0 %v300
    %v314 = vpop.f32.mrf.mxu0
    %v315 = vadd.f32 0.0, %v314
    %v316 = vpop.f32.mrf.mxu0
    %317 = vdwg.mxu0
    %vm318 = vcmask 64512
    %v319 = vsel %vm318, %v296, -inf
    %320 = vmax.xlane.f32.xlu0 %v319
    %v321 = vpop.xlane.xlu0 %320
    %v322 = vsel %vm318, %v315, -inf
    %323 = vmax.xlane.f32.xlu0 %v322
    %v324 = vpop.xlane.xlu0 %323
    %v325 = vsub.f32 %v296, %v321
    %v326 = vsub.f32 %v315, %v324
    %v327 = vmul.f32 %v325, 1.442695
    %v328 = vpow.pop %v327
    %v329 = vmul.f32 %v326, 1.442695
    %v330 = vpow.pop %v329
    %v331 = vsel %vm318, %v328, 0.0
    %332 = vadd.xlane.f32.xlu0 %v331
    %v333 = vpop.xlane.xlu0 %332
    %v334 = vsel %vm318, %v330, 0.0
    %335 = vadd.xlane.f32.xlu0 %v334
    %v336 = vpop.xlane.xlu0 %335
    %v337 = vrcp.pop %v333
    %v338 = vrcp.pop %v336
    %v339 = vmul.f32 %v328, %v337
    %v340 = vmul.f32 %v330, %v338
    %v341 = vpack.c.bf16 %v339, %v339
    %v342 = vpack.c.bf16 %v340, %v340
    %v344 = vsel %vm318, %v341, 0
    %vm346 = vcmask 1043456
    %v348 = vsel %vm346, %v272, 0
    %350 = vmatpush.bf16.msra.mxu0 0
    %351 = vmatpush.bf16.msra.mxu0 0
    %352 = vmatpush.bf16.msra.mxu0 0
    %353 = vmatpush.bf16.msra.mxu0 0
    %354 = vmatpush.bf16.msra.mxu0 0
    %355 = vmatpush.bf16.msra.mxu0 0
    %356 = vmatpush.bf16.msra.mxu0 0
    %357 = vmatpush.bf16.msra.mxu0 %v348
    %358 = vmatmul.bf16.gmra.mxu0 %v344
    %v359 = vpop.f32.mrf.mxu0
    %v360 = vadd.f32 0.0, %v359
    %v361 = vpop.f32.mrf.mxu0
    %362 = vdwg.mxu0
    %v364 = vsel %vm318, %v342, 0
    %v367 = vsel %vm346, %v274, 0
    %369 = vmatpush.bf16.msra.mxu0 0
    %370 = vmatpush.bf16.msra.mxu0 0
    %371 = vmatpush.bf16.msra.mxu0 0
    %372 = vmatpush.bf16.msra.mxu0 0
    %373 = vmatpush.bf16.msra.mxu0 0
    %374 = vmatpush.bf16.msra.mxu0 0
    %375 = vmatpush.bf16.msra.mxu0 0
    %376 = vmatpush.bf16.msra.mxu0 %v367
    %377 = vmatmul.bf16.gmra.mxu0 %v364
    %v378 = vpop.f32.mrf.mxu0
    %v379 = vadd.f32 0.0, %v378
    %v380 = vpop.f32.mrf.mxu0
    %381 = vdwg.mxu0
    %v382 = vpack.c.bf16 %v360, %v360
    %v383 = vpack.c.bf16 %v379, %v379
    %384 = vrot.lane.b32.xlu0 %v271, 96
    %v385 = vpop.permute.xlu0 %384
    %386 = vrot.lane.b32.xlu0 %v273, 96
    %v387 = vpop.permute.xlu0 %386
    %v388 = vrot.slane %v385, 4
    %v389 = vrot.slane %v387, 4
    %v390 = vunpack.c.l.b16 %v271
    %v391 = vpack.c.b16 %v390, %v390
    %392 = vrot.lane.b32.xlu0 %v391, 96
    %v393 = vpop.permute.xlu0 %392
    %v395 = vsel %vm279, %v393, 0
    %v398 = vsel %vm279, %v388, 0
    %400 = vmatpush.bf16.xpose.msra.mxu0 0
    %401 = vmatpush.bf16.xpose.msra.mxu0 0
    %402 = vmatpush.bf16.xpose.msra.mxu0 0
    %403 = vmatpush.bf16.xpose.msra.mxu0 0
    %404 = vmatpush.bf16.xpose.msra.mxu0 0
    %405 = vmatpush.bf16.xpose.msra.mxu0 0
    %406 = vmatpush.bf16.xpose.msra.mxu0 0
    %407 = vmatpush.bf16.xpose.msra.mxu0 %v398
    %408 = vmatmul.bf16.gmra.mxu0 %v395
    %v409 = vpop.f32.mrf.mxu0
    %v410 = vadd.f32 0.0, %v409
    %v411 = vpop.f32.mrf.mxu0
    %412 = vdwg.mxu0
    %v413 = vunpack.c.l.b16 %v273
    %v414 = vpack.c.b16 %v413, %v413
    %415 = vrot.lane.b32.xlu0 %v414, 96
    %v416 = vpop.permute.xlu0 %415
    %v418 = vsel %vm279, %v416, 0
    %v421 = vsel %vm279, %v389, 0
    %423 = vmatpush.bf16.xpose.msra.mxu0 0
    %424 = vmatpush.bf16.xpose.msra.mxu0 0
    %425 = vmatpush.bf16.xpose.msra.mxu0 0
    %426 = vmatpush.bf16.xpose.msra.mxu0 0
    %427 = vmatpush.bf16.xpose.msra.mxu0 0
    %428 = vmatpush.bf16.xpose.msra.mxu0 0
    %429 = vmatpush.bf16.xpose.msra.mxu0 0
    %430 = vmatpush.bf16.xpose.msra.mxu0 %v421
    %431 = vmatmul.bf16.gmra.mxu0 %v418
    %v432 = vpop.f32.mrf.mxu0
    %v433 = vadd.f32 0.0, %v432
    %v434 = vpop.f32.mrf.mxu0
    %435 = vdwg.mxu0
    %v436 = vsel %vm318, %v410, -inf
    %437 = vmax.xlane.f32.xlu0 %v436
    %v438 = vpop.xlane.xlu0 %437
    %v439 = vsel %vm318, %v433, -inf
    %440 = vmax.xlane.f32.xlu0 %v439
    %v441 = vpop.xlane.xlu0 %440
    %v442 = vsub.f32 %v410, %v438
    %v443 = vsub.f32 %v433, %v441
    %v444 = vmul.f32 %v442, 1.442695
    %v445 = vpow.pop %v444
    %v446 = vmul.f32 %v443, 1.442695
    %v447 = vpow.pop %v446
    %v448 = vsel %vm318, %v445, 0.0
    %449 = vadd.xlane.f32.xlu0 %v448
    %v450 = vpop.xlane.xlu0 %449
    %v451 = vsel %vm318, %v447, 0.0
    %452 = vadd.xlane.f32.xlu0 %v451
    %v453 = vpop.xlane.xlu0 %452
    %v454 = vrcp.pop %v450
    %v455 = vrcp.pop %v453
    %v456 = vmul.f32 %v445, %v454
    %v457 = vmul.f32 %v447, %v455
    %v458 = vpack.c.bf16 %v456, %v456
    %v459 = vpack.c.bf16 %v457, %v457
    %v461 = vunpack.c.l.b16 %v272
    %v462 = vpack.c.b16 %v461, %v461
    %463 = vrot.lane.b32.xlu0 %v462, 96
    %v464 = vpop.permute.xlu0 %463
    %v466 = vsel %vm318, %v458, 0
    %v469 = vsel %vm346, %v464, 0
    %471 = vmatpush.bf16.msra.mxu0 0
    %472 = vmatpush.bf16.msra.mxu0 0
    %473 = vmatpush.bf16.msra.mxu0 0
    %474 = vmatpush.bf16.msra.mxu0 0
    %475 = vmatpush.bf16.msra.mxu0 0
    %476 = vmatpush.bf16.msra.mxu0 0
    %477 = vmatpush.bf16.msra.mxu0 0
    %478 = vmatpush.bf16.msra.mxu0 %v469
    %479 = vmatmul.bf16.gmra.mxu0 %v466
    %v480 = vpop.f32.mrf.mxu0
    %v481 = vadd.f32 0.0, %v480
    %v482 = vpop.f32.mrf.mxu0
    %483 = vdwg.mxu0
    %v485 = vunpack.c.l.b16 %v274
    %v486 = vpack.c.b16 %v485, %v485
    %487 = vrot.lane.b32.xlu0 %v486, 96
    %v488 = vpop.permute.xlu0 %487
    %v490 = vsel %vm318, %v459, 0
    %v493 = vsel %vm346, %v488, 0
    %495 = vmatpush.bf16.msra.mxu0 0
    %496 = vmatpush.bf16.msra.mxu0 0
    %497 = vmatpush.bf16.msra.mxu0 0
    %498 = vmatpush.bf16.msra.mxu0 0
    %499 = vmatpush.bf16.msra.mxu0 0
    %500 = vmatpush.bf16.msra.mxu0 0
    %501 = vmatpush.bf16.msra.mxu0 0
    %502 = vmatpush.bf16.msra.mxu0 %v493
    %503 = vmatmul.bf16.gmra.mxu0 %v490
    %v504 = vpop.f32.mrf.mxu0
    %v505 = vadd.f32 0.0, %v504
    %v506 = vpop.f32.mrf.mxu0
    %507 = vdwg.mxu0
    %v508 = vpack.c.bf16 %v481, %v481
    %v509 = vpack.c.bf16 %v505, %v505
    %510 = vrot.lane.b32.xlu0 %v271, 64
    %v511 = vpop.permute.xlu0 %510
    %512 = vrot.lane.b32.xlu0 %v273, 64
    %v513 = vpop.permute.xlu0 %512
    %v514 = vrot.slane %v511, 4
    %v515 = vrot.slane %v513, 4
    %516 = vrot.lane.b32.xlu0 %v391, 64
    %v517 = vpop.permute.xlu0 %516
    %v519 = vsel %vm279, %v517, 0
    %v522 = vsel %vm279, %v514, 0
    %524 = vmatpush.bf16.xpose.msra.mxu0 0
    %525 = vmatpush.bf16.xpose.msra.mxu0 0
    %526 = vmatpush.bf16.xpose.msra.mxu0 0
    %527 = vmatpush.bf16.xpose.msra.mxu0 0
    %528 = vmatpush.bf16.xpose.msra.mxu0 0
    %529 = vmatpush.bf16.xpose.msra.mxu0 0
    %530 = vmatpush.bf16.xpose.msra.mxu0 0
    %531 = vmatpush.bf16.xpose.msra.mxu0 %v522
    %532 = vmatmul.bf16.gmra.mxu0 %v519
    %v533 = vpop.f32.mrf.mxu0
    %v534 = vadd.f32 0.0, %v533
    %v535 = vpop.f32.mrf.mxu0
    %536 = vdwg.mxu0
    %537 = vrot.lane.b32.xlu0 %v414, 64
    %v538 = vpop.permute.xlu0 %537
    %v540 = vsel %vm279, %v538, 0
    %v543 = vsel %vm279, %v515, 0
    %545 = vmatpush.bf16.xpose.msra.mxu0 0
    %546 = vmatpush.bf16.xpose.msra.mxu0 0
    %547 = vmatpush.bf16.xpose.msra.mxu0 0
    %548 = vmatpush.bf16.xpose.msra.mxu0 0
    %549 = vmatpush.bf16.xpose.msra.mxu0 0
    %550 = vmatpush.bf16.xpose.msra.mxu0 0
    %551 = vmatpush.bf16.xpose.msra.mxu0 0
    %552 = vmatpush.bf16.xpose.msra.mxu0 %v543
    %553 = vmatmul.bf16.gmra.mxu0 %v540
    %v554 = vpop.f32.mrf.mxu0
    %v555 = vadd.f32 0.0, %v554
    %v556 = vpop.f32.mrf.mxu0
    %557 = vdwg.mxu0
    %v558 = vsel %vm318, %v534, -inf
    %559 = vmax.xlane.f32.xlu0 %v558
    %v560 = vpop.xlane.xlu0 %559
    %v561 = vsel %vm318, %v555, -inf
    %562 = vmax.xlane.f32.xlu0 %v561
    %v563 = vpop.xlane.xlu0 %562
    %v564 = vsub.f32 %v534, %v560
    %v565 = vsub.f32 %v555, %v563
    %v566 = vmul.f32 %v564, 1.442695
    %v567 = vpow.pop %v566
    %v568 = vmul.f32 %v565, 1.442695
    %v569 = vpow.pop %v568
    %v570 = vsel %vm318, %v567, 0.0
    %571 = vadd.xlane.f32.xlu0 %v570
    %v572 = vpop.xlane.xlu0 %571
    %v573 = vsel %vm318, %v569, 0.0
    %574 = vadd.xlane.f32.xlu0 %v573
    %v575 = vpop.xlane.xlu0 %574
    %v576 = vrcp.pop %v572
    %v577 = vrcp.pop %v575
    %v578 = vmul.f32 %v567, %v576
    %v579 = vmul.f32 %v569, %v577
    %v580 = vpack.c.bf16 %v578, %v578
    %v581 = vpack.c.bf16 %v579, %v579
    %582 = vrot.lane.b32.xlu0 %v462, 64
    %v583 = vpop.permute.xlu0 %582
    %v585 = vsel %vm318, %v580, 0
    %v588 = vsel %vm346, %v583, 0
    %590 = vmatpush.bf16.msra.mxu0 0
    %591 = vmatpush.bf16.msra.mxu0 0
    %592 = vmatpush.bf16.msra.mxu0 0
    %593 = vmatpush.bf16.msra.mxu0 0
    %594 = vmatpush.bf16.msra.mxu0 0
    %595 = vmatpush.bf16.msra.mxu0 0
    %596 = vmatpush.bf16.msra.mxu0 0
    %597 = vmatpush.bf16.msra.mxu0 %v588
    %598 = vmatmul.bf16.gmra.mxu0 %v585
    %v599 = vpop.f32.mrf.mxu0
    %v600 = vadd.f32 0.0, %v599
    %v601 = vpop.f32.mrf.mxu0
    %602 = vdwg.mxu0
    %603 = vrot.lane.b32.xlu0 %v486, 64
    %v604 = vpop.permute.xlu0 %603
    %v606 = vsel %vm318, %v581, 0
    %v609 = vsel %vm346, %v604, 0
    %611 = vmatpush.bf16.msra.mxu0 0
    %612 = vmatpush.bf16.msra.mxu0 0
    %613 = vmatpush.bf16.msra.mxu0 0
    %614 = vmatpush.bf16.msra.mxu0 0
    %615 = vmatpush.bf16.msra.mxu0 0
    %616 = vmatpush.bf16.msra.mxu0 0
    %617 = vmatpush.bf16.msra.mxu0 0
    %618 = vmatpush.bf16.msra.mxu0 %v609
    %619 = vmatmul.bf16.gmra.mxu0 %v606
    %v620 = vpop.f32.mrf.mxu0
    %v621 = vadd.f32 0.0, %v620
    %v622 = vpop.f32.mrf.mxu0
    %623 = vdwg.mxu0
    %v624 = vpack.c.bf16 %v600, %v600
    %v625 = vpack.c.bf16 %v621, %v621
    %626 = vrot.lane.b32.xlu0 %v271, 32
    %v627 = vpop.permute.xlu0 %626
    %628 = vrot.lane.b32.xlu0 %v273, 32
    %v629 = vpop.permute.xlu0 %628
    %v630 = vrot.slane %v627, 4
    %v631 = vrot.slane %v629, 4
    %632 = vrot.lane.b32.xlu0 %v391, 32
    %v633 = vpop.permute.xlu0 %632
    %v635 = vsel %vm279, %v633, 0
    %v638 = vsel %vm279, %v630, 0
    %640 = vmatpush.bf16.xpose.msra.mxu0 0
    %641 = vmatpush.bf16.xpose.msra.mxu0 0
    %642 = vmatpush.bf16.xpose.msra.mxu0 0
    %643 = vmatpush.bf16.xpose.msra.mxu0 0
    %644 = vmatpush.bf16.xpose.msra.mxu0 0
    %645 = vmatpush.bf16.xpose.msra.mxu0 0
    %646 = vmatpush.bf16.xpose.msra.mxu0 0
    %647 = vmatpush.bf16.xpose.msra.mxu0 %v638
    %648 = vmatmul.bf16.gmra.mxu0 %v635
    %v649 = vpop.f32.mrf.mxu0
    %v650 = vadd.f32 0.0, %v649
    %v651 = vpop.f32.mrf.mxu0
    %652 = vdwg.mxu0
    %653 = vrot.lane.b32.xlu0 %v414, 32
    %v654 = vpop.permute.xlu0 %653
    %v656 = vsel %vm279, %v654, 0
    %v659 = vsel %vm279, %v631, 0
    %661 = vmatpush.bf16.xpose.msra.mxu0 0
    %662 = vmatpush.bf16.xpose.msra.mxu0 0
    %663 = vmatpush.bf16.xpose.msra.mxu0 0
    %664 = vmatpush.bf16.xpose.msra.mxu0 0
    %665 = vmatpush.bf16.xpose.msra.mxu0 0
    %666 = vmatpush.bf16.xpose.msra.mxu0 0
    %667 = vmatpush.bf16.xpose.msra.mxu0 0
    %668 = vmatpush.bf16.xpose.msra.mxu0 %v659
    %669 = vmatmul.bf16.gmra.mxu0 %v656
    %v670 = vpop.f32.mrf.mxu0
    %v671 = vadd.f32 0.0, %v670
    %v672 = vpop.f32.mrf.mxu0
    %673 = vdwg.mxu0
    %v674 = vsel %vm318, %v650, -inf
    %675 = vmax.xlane.f32.xlu0 %v674
    %v676 = vpop.xlane.xlu0 %675
    %v677 = vsel %vm318, %v671, -inf
    %678 = vmax.xlane.f32.xlu0 %v677
    %v679 = vpop.xlane.xlu0 %678
    %v680 = vsub.f32 %v650, %v676
    %v681 = vsub.f32 %v671, %v679
    %v682 = vmul.f32 %v680, 1.442695
    %v683 = vpow.pop %v682
    %v684 = vmul.f32 %v681, 1.442695
    %v685 = vpow.pop %v684
    %v686 = vsel %vm318, %v683, 0.0
    %687 = vadd.xlane.f32.xlu0 %v686
    %v688 = vpop.xlane.xlu0 %687
    %v689 = vsel %vm318, %v685, 0.0
    %690 = vadd.xlane.f32.xlu0 %v689
    %v691 = vpop.xlane.xlu0 %690
    %v692 = vrcp.pop %v688
    %v693 = vrcp.pop %v691
    %v694 = vmul.f32 %v683, %v692
    %v695 = vmul.f32 %v685, %v693
    %v696 = vpack.c.bf16 %v694, %v694
    %v697 = vpack.c.bf16 %v695, %v695
    %698 = vrot.lane.b32.xlu0 %v462, 32
    %v699 = vpop.permute.xlu0 %698
    %v701 = vsel %vm318, %v696, 0
    %v704 = vsel %vm346, %v699, 0
    %706 = vmatpush.bf16.msra.mxu0 0
    %707 = vmatpush.bf16.msra.mxu0 0
    %708 = vmatpush.bf16.msra.mxu0 0
    %709 = vmatpush.bf16.msra.mxu0 0
    %710 = vmatpush.bf16.msra.mxu0 0
    %711 = vmatpush.bf16.msra.mxu0 0
    %712 = vmatpush.bf16.msra.mxu0 0
    %713 = vmatpush.bf16.msra.mxu0 %v704
    %714 = vmatmul.bf16.gmra.mxu0 %v701
    %v715 = vpop.f32.mrf.mxu0
    %v716 = vadd.f32 0.0, %v715
    %v717 = vpop.f32.mrf.mxu0
    %718 = vdwg.mxu0
    %719 = vrot.lane.b32.xlu0 %v486, 32
    %v720 = vpop.permute.xlu0 %719
    %v722 = vsel %vm318, %v697, 0
    %v725 = vsel %vm346, %v720, 0
    %727 = vmatpush.bf16.msra.mxu0 0
    %728 = vmatpush.bf16.msra.mxu0 0
    %729 = vmatpush.bf16.msra.mxu0 0
    %730 = vmatpush.bf16.msra.mxu0 0
    %731 = vmatpush.bf16.msra.mxu0 0
    %732 = vmatpush.bf16.msra.mxu0 0
    %733 = vmatpush.bf16.msra.mxu0 0
    %734 = vmatpush.bf16.msra.mxu0 %v725
    %735 = vmatmul.bf16.gmra.mxu0 %v722
    %v736 = vpop.f32.mrf.mxu0
    %v737 = vadd.f32 0.0, %v736
    %v738 = vpop.f32.mrf.mxu0
    %739 = vdwg.mxu0
    %v740 = vpack.c.bf16 %v716, %v716
    %v741 = vpack.c.bf16 %v737, %v737
    %v744 = vunpack.c.l.b16 %v508
    %v745 = vunpack.c.l.b16 %v509
    %v746 = vpack.c.b16 %v744, %v744
    %v747 = vpack.c.b16 %v745, %v745
    %748 = vrot.lane.b32.xlu0 %v746, 32
    %v749 = vpop.permute.xlu0 %748
    %750 = vrot.lane.b32.xlu0 %v747, 32
    %v751 = vpop.permute.xlu0 %750
    %v754 = vunpack.c.l.b16 %v624
    %v755 = vunpack.c.l.b16 %v625
    %v756 = vpack.c.b16 %v754, %v754
    %v757 = vpack.c.b16 %v755, %v755
    %758 = vrot.lane.b32.xlu0 %v756, 64
    %v759 = vpop.permute.xlu0 %758
    %760 = vrot.lane.b32.xlu0 %v757, 64
    %v761 = vpop.permute.xlu0 %760
    %v764 = vunpack.c.l.b16 %v740
    %v765 = vunpack.c.l.b16 %v741
    %v766 = vpack.c.b16 %v764, %v764
    %v767 = vpack.c.b16 %v765, %v765
    %768 = vrot.lane.b32.xlu0 %v766, 96
    %v769 = vpop.permute.xlu0 %768
    %770 = vrot.lane.b32.xlu0 %v767, 96
    %v771 = vpop.permute.xlu0 %770
    %v774 = vsel %vm279, %v382, %v749
    %v777 = vsel %vm279, %v383, %v751
    %vm778 = vcmask 523264
    %v780 = vsel %vm778, %v774, %v759
    %v782 = vsel %vm778, %v777, %v761
    %vm783 = vcmask 785408
    %v785 = vsel %vm783, %v780, %v769
    %v787 = vsel %vm783, %v782, %v771
    %v788 = vld [vmem:[#allocation7] sm:$0xf]
    %v789 = vld [vmem:[#allocation7 + $0x4] sm:$0xf]
    %v790 = vld [vmem:[#allocation7 + $0x8] sm:$0xf]
    %v791 = vld [vmem:[#allocation7 + $0xc] sm:$0xf]
    %v792 = vld [vmem:[#allocation7 + $0x10] sm:$0xf]
    %v793 = vld [vmem:[#allocation7 + $0x14] sm:$0xf]
    %v794 = vld [vmem:[#allocation7 + $0x18] sm:$0xf]
    %v795 = vld [vmem:[#allocation7 + $0x1c] sm:$0xf]
    %v796 = vld [vmem:[#allocation7 + $0x20] sm:$0xf]
    %v797 = vld [vmem:[#allocation7 + $0x24] sm:$0xf]
    %v798 = vld [vmem:[#allocation7 + $0x28] sm:$0xf]
    %v799 = vld [vmem:[#allocation7 + $0x2c] sm:$0xf]
    %v800 = vld [vmem:[#allocation7 + $0x30] sm:$0xf]
    %v801 = vld [vmem:[#allocation7 + $0x34] sm:$0xf]
    %v802 = vld [vmem:[#allocation7 + $0x38] sm:$0xf]
    %v803 = vld [vmem:[#allocation7 + $0x3c] sm:$0xf]
    %v804 = vld [vmem:[%s3] sm:$0x1]
    %v806 = vperm.slane %v804, 0
    %v810 = vunpack.c.l.b16 %v785
    %v811 = vunpack.c.l.b16 %v787
    %v812 = vpack.c.b16 %v811, %v810
    %v830 = vunpack.c.l.b16 %v788
    %v831 = vunpack.c.l.b16 %v789
    %v832 = vunpack.c.l.b16 %v790
    %v833 = vunpack.c.l.b16 %v791
    %v834 = vunpack.c.l.b16 %v792
    %v835 = vunpack.c.l.b16 %v793
    %v836 = vunpack.c.l.b16 %v794
    %v837 = vunpack.c.l.b16 %v795
    %v838 = vunpack.c.l.b16 %v796
    %v839 = vunpack.c.l.b16 %v797
    %v840 = vunpack.c.l.b16 %v798
    %v841 = vunpack.c.l.b16 %v799
    %v842 = vunpack.c.l.b16 %v800
    %v843 = vunpack.c.l.b16 %v801
    %v844 = vunpack.c.l.b16 %v802
    %v845 = vunpack.c.l.b16 %v803
    %v846 = vpack.c.b16 %v831, %v830
    %v847 = vpack.c.b16 %v833, %v832
    %v848 = vpack.c.b16 %v835, %v834
    %v849 = vpack.c.b16 %v837, %v836
    %v850 = vpack.c.b16 %v839, %v838
    %v851 = vpack.c.b16 %v841, %v840
    %v852 = vpack.c.b16 %v843, %v842
    %v853 = vpack.c.b16 %v845, %v844
    %862 = vmatpush.bf16.msra.mxu0 %v853
    %863 = vmatpush.bf16.msra.mxu0 %v852
    %864 = vmatpush.bf16.msra.mxu0 %v851
    %865 = vmatpush.bf16.msra.mxu0 %v850
    %866 = vmatpush.bf16.msra.mxu0 %v849
    %867 = vmatpush.bf16.msra.mxu0 %v848
    %868 = vmatpush.bf16.msra.mxu0 %v847
    %869 = vmatpush.bf16.msra.mxu0 %v846
    %870 = vmatmul.bf16.gmra.mxu0 %v812
    %v871 = vpop.f32.mrf.mxu0
    %v872 = vadd.f32 %v806, %v871
    %v873 = vpop.f32.mrf.mxu0
    %v874 = vadd.f32 %v806, %v873
    %875 = vdwg.mxu0
    %876 = vst [vmem:[#allocation8] sm:$0xff] %v872
    %877 = vst [vmem:[#allocation8 + $0x8] sm:$0xff] %v874
    // Predicated region
    $region30: #{tpu_custom_call.1} parent=1 // pred_check
      _
    $region31: #{tpu_custom_call.1} parent=1 // pred_check_branch
      %879 = sbr.rel (0) target = $region33
    $region32: #{tpu_custom_call.1} parent=1 // pred_region
      %881 = vsyncadd [#allocation4], 0
      %s882 = sshll.u32 [#allocation8], 4
      %s883 = int_to_ptr.vmem [resolvable:$true] %s882
      %s884 = sshll.u32 %s4, 4
      %s885 = int_to_ptr.hbm [resolvable:$true] %s884
      %890 = dma.vmem_to_hbm [thread:$0]  %s883, 256, %s885, [#allocation4], 128, 128, 8
    $region33: #{tpu_custom_call.1} parent=1 // pred_fallthru
      _
    // Predicated region
    $region34: #{tpu_custom_call.1} parent=1 // pred_check
      _
    $region35: #{tpu_custom_call.1} parent=1 // pred_check_branch
      %892 = sbr.rel (0) target = $region37
    $region36: #{tpu_custom_call.1} parent=1 // pred_region
      %894 = dma.done [#allocation4], 256
    $region37: #{tpu_custom_call.1} parent=1 // pred_fallthru
      _
    %895 = vsyncpa [#allocation3], 1
    %896 = vsyncpa [#allocation6], 1
    %897 = vsyncpa [#allocation4], 1

</llo_original>
